<compile_context>
chip_gen: v6e
topology: v6e:2x2x1
jax: 0.10.0
libtpu: 0.0.40
codegen_flags: <defaults>
</compile_context>

<pallas_src>
import functools

import numpy as np
import jax
import jax.numpy as jnp
from jax import lax
from jax.experimental import pallas as pl
from jax.experimental.pallas import tpu as pltpu


# ----------------------------------------------------------------------------
# Fused Pallas kernel: all scales, all layers of MsImageDis.forward
# ----------------------------------------------------------------------------
def _act(y, activation, slope):
    if activation == "lrelu":
        return jnp.maximum(y, slope * y)       # single vmax (0 < slope < 1)
    if activation == "relu":
        return jnp.maximum(y, 0.0)
    if activation == "tanh":
        return jnp.tanh(y)
    return y                                   # 'none'


def _ms_dis_kernel(*refs, metas, activation, slope, pad_type):
    """Per scale the inputs are (all full-array VMEM blocks, everything tiny):

      mat1 (M1, 36*Cin) bf16 : 6x6 / stride-4 block-im2col of the reflect-padded
                               scale input, rows ordered (n, p, q)
      w1   (36*Cin, 4*C1) bf16 , b1 (1, 4*C1) f32 : layer-1 weights, s2d-packed
      w2   (36*C1, C2)    bf16 , b2 (1, C2)   f32 : layer-2 weights, s2d-packed
      w3   (1, C2) f32 , b3 (1, 1) f32             : final 1x1 conv

    and one (M2, 1) f32 output per scale (single tiny masked store; all other
    intermediates never leave the kernel).
    """
    n_scales = len(metas)
    in_refs = refs[: 7 * n_scales]
    out_refs = refs[7 * n_scales:]

    for s, (N, P, Q, C1, _C2) in enumerate(metas):
        (mat1_ref, w1_ref, b1_ref, w2_ref, b2_ref,
         w3_ref, b3_ref) = in_refs[7 * s: 7 * s + 7]
        out_ref = out_refs[s]
        C4 = 4 * C1

        # ---- layer 1: 4x4/s2 conv as one MXU matmul; output already in s2d layout
        h1 = jnp.dot(mat1_ref[...], w1_ref[...],
                     preferred_element_type=jnp.float32)
        h1 = _act(h1 + b1_ref[...], activation, slope)        # (N*P*Q, 4*C1) f32

        # ---- layer 2: 3x3 stride-1 conv over the s2d tensor (contiguous slices only)
        # slabs[n][p] = one s2d block-row of image n, padded along W
        padded = []
        for n in range(N):
            row = []
            for p in range(P):
                r0 = (n * P + p) * Q
                slab = h1[r0:r0 + Q, :]                        # (Q, 4*C1)
                if pad_type == "zero":
                    edge = jnp.zeros((1, C4), jnp.float32)
                    slab = jnp.concatenate([edge, slab, edge], axis=0)
                else:  # 'reflect' -> edge copy in s2d space (exact, see wrapper notes)
                    slab = jnp.concatenate(
                        [slab[0:1, :], slab, slab[Q - 1:Q, :]], axis=0)
                row.append(slab)                               # (Q+2, 4*C1)
            padded.append(row)

        zero_slab = jnp.zeros((Q + 2, C4), jnp.float32)
        blocks = []
        for n in range(N):
            for oh in range(P):
                taps = []
                for dp in range(3):
                    p_idx = oh - 1 + dp
                    if 0 <= p_idx < P:
                        src = padded[n][p_idx]
                    elif pad_type == "zero":
                        src = zero_slab
                    else:                                      # reflect -> clamp
                        src = padded[n][min(max(p_idx, 0), P - 1)]
                    for dq in range(3):
                        taps.append(src[dq:dq + Q, :])         # (Q, 4*C1)
                blocks.append(jnp.concatenate(taps, axis=-1))  # (Q, 36*C1)
        m2 = jnp.concatenate(blocks, axis=0).astype(jnp.bfloat16)   # (N*P*Q, 36*C1)

        h2 = jnp.dot(m2, w2_ref[...], preferred_element_type=jnp.float32)
        h2 = _act(h2 + b2_ref[...], activation, slope)         # (N*P*Q, C2) f32

        # ---- final 1x1 conv: VPU multiply + XLU lane reduction (no N=1 MXU dot)
        out = jnp.sum(h2 * w3_ref[...], axis=-1, keepdims=True) + b3_ref[...]
        out_ref[...] = out.astype(out_ref.dtype)


def _full_spec(shape):
    nd = len(shape)

    def idx(i):
        return (0,) * nd

    return pl.BlockSpec(shape, idx)


# ----------------------------------------------------------------------------
# Wrapper-side (XLA) preprocessing: block-im2col, weight repacking, avg-pool
# ----------------------------------------------------------------------------
def _block_im2col(x, pad_type):
    """6x6 / stride-4 patches of the pad-by-1 input; rows (n,p,q), cols (i6,j6,c)."""
    N, H, W, C = x.shape
    assert H % 4 == 0 and W % 4 == 0, "spatial dims must be divisible by 4"
    mode = {"zero": "constant", "reflect": "reflect", "replicate": "edge"}[pad_type]
    xp = jnp.pad(x, ((0, 0), (1, 1), (1, 1), (0, 0)), mode=mode)
    P, Q = H // 4, W // 4
    cols = []
    for i in range(6):
        for j in range(6):
            cols.append(lax.slice(
                xp, (0, i, j, 0),
                (N, i + 4 * (P - 1) + 1, j + 4 * (Q - 1) + 1, C),
                (1, 4, 4, 1)))
    mat = jnp.concatenate(cols, axis=-1).reshape(N * P * Q, 36 * C)
    return mat.astype(jnp.bfloat16)


def _prep_scale_params(layers):
    """Repack PyTorch-layout weights into the s2d matmul forms used in-kernel."""
    (w1, b1), (w2, b2), (w3, b3) = layers
    C1, Cin = w1.shape[0], w1.shape[1]
    C2 = w2.shape[0]

    # layer 1: W1_blk[(i6,j6,ci), (r,s,co)] = w1[co,ci,i6-2r,j6-2s]  (0 outside)
    base1 = jnp.transpose(w1, (2, 3, 1, 0))                         # (4,4,Cin,C1)
    parts = [jnp.pad(base1, ((2 * r, 2 - 2 * r), (2 * s, 2 - 2 * s),
                             (0, 0), (0, 0)))
             for r in range(2) for s in range(2)]
    w1_blk = jnp.stack(parts, axis=3).reshape(36 * Cin, 4 * C1).astype(jnp.bfloat16)
    b1_blk = jnp.tile(b1, 4).reshape(1, 4 * C1).astype(jnp.float32)

    # layer 2: W2_blk[(dp,dq,r,s,ci), co] = w2[co,ci,2dp+r-1,2dq+s-1] (0 outside)
    base2 = jnp.pad(jnp.transpose(w2, (2, 3, 1, 0)),
                    ((1, 1), (1, 1), (0, 0), (0, 0)))                # (6,6,C1,C2)
    w2_blk = jnp.transpose(base2.reshape(3, 2, 3, 2, C1, C2),
                           (0, 2, 1, 3, 4, 5)).reshape(36 * C1, C2)
    w2_blk = w2_blk.astype(jnp.bfloat16)
    b2_r = b2.reshape(1, C2).astype(jnp.float32)

    w3_r = w3.reshape(1, C2).astype(jnp.float32)
    b3_r = b3.reshape(1, 1).astype(jnp.float32)
    return (w1_blk, b1_blk, w2_blk, b2_r, w3_r, b3_r)


def _avg_pool_3x3_s2_nhwc(x):
    """AvgPool2d(3, stride=2, padding=1, count_include_pad=False) in NHWC."""
    _, H, W, _ = x.shape
    sums = lax.reduce_window(x, 0.0, lax.add, (1, 3, 3, 1), (1, 2, 2, 1),
                             ((0, 0), (1, 1), (1, 1), (0, 0)))

    def counts(L):
        Lo = (L - 1) // 2 + 1
        st = np.arange(Lo) * 2 - 1
        return (np.minimum(st + 2, L - 1) - np.maximum(st, 0) + 1).astype(np.float32)

    inv = 1.0 / np.outer(counts(H), counts(W))
    return sums * jnp.asarray(inv[None, :, :, None])


# ----------------------------------------------------------------------------
# Parameter construction (deterministic, synthetic) and forward passes
# ----------------------------------------------------------------------------
def init_ms_image_dis_params(key, config):
    dim, n_layer = config["dim"], config["n_layer"]
    input_dim, num_scales = config["input_dim"], config["num_scales"]
    scales = []
    for _ in range(num_scales):
        layers = []
        d_in, d_out = input_dim, dim
        for _ in range(n_layer):
            key, kw_, kb_ = jax.random.split(key, 3)
            w = jax.random.normal(kw_, (d_out, d_in, 4, 4), jnp.float32) * 0.05
            b = jax.random.normal(kb_, (d_out,), jnp.float32) * 0.05
            layers.append((w, b))
            d_in, d_out = d_out, d_out * 2
        key, kw_, kb_ = jax.random.split(key, 3)
        w = jax.random.normal(kw_, (1, d_in, 1, 1), jnp.float32) * 0.05
        b = jax.random.normal(kb_, (1,), jnp.float32) * 0.05
        layers.append((w, b))
        scales.append(layers)
    return scales, key


def ms_image_dis_forward(scales_params, x_nchw, config):
    assert config["n_layer"] == 2, "TODO(synk): fused path only covers n_layer == 2"
    assert config["norm"] in ("none",), "TODO(synk): norm layers not implemented"
    assert config["pad_type"] in ("reflect", "zero"), \
        "TODO(synk): replicate padding not implemented in the fused kernel"
    assert config["activ"] in ("lrelu", "relu", "tanh", "none")

    x = jnp.transpose(x_nchw, (0, 2, 3, 1))        # NCHW -> NHWC once
    N = x.shape[0]

    mats, params, metas, out_shapes = [], [], [], []
    xs = x
    for layers in scales_params:
        H, W = xs.shape[1], xs.shape[2]
        P, Q = H // 4, W // 4
        C1 = layers[0][0].shape[0]
        C2 = layers[1][0].shape[0]
        mats.append(_block_im2col(xs, config["pad_type"]))
        params.append(_prep_scale_params(layers))
        metas.append((N, P, Q, C1, C2))
        out_shapes.append(jax.ShapeDtypeStruct((N * P * Q, 1), jnp.float32))
        xs = _avg_pool_3x3_s2_nhwc(xs)             # downsample for next scale

    in_arrays = []
    for mat, prm in zip(mats, params):
        in_arrays.append(mat)
        in_arrays.extend(prm)

    kernel = functools.partial(
        _ms_dis_kernel, metas=tuple(metas),
        activation=config["activ"], slope=0.2, pad_type=config["pad_type"])

    outs = pl.pallas_call(
        kernel,
        out_shape=tuple(out_shapes),
        grid=(1,),
        in_specs=[_full_spec(a.shape) for a in in_arrays],
        out_specs=tuple(_full_spec(s.shape) for s in out_shapes),
        compiler_params=pltpu.CompilerParams(
            dimension_semantics=("arbitrary",)),
    )(*in_arrays)

    results = []
    for out, (N_, P, Q, _, _) in zip(outs, metas):
        # rows are (n, oh, ow); channel dim is 1 so this reshape is the NCHW output
        results.append(out.reshape(N_, 1, P, Q))
    return results


def mc_image_dis_forward(disc_params, x, contrast, config):
    # McImageDis.forward: dispatch to the selected contrast's MsImageDis
    return ms_image_dis_forward(disc_params[contrast], x, config)


# ----------------------------------------------------------------------------
# Pure-JAX reference (XLA convs) for a tolerance sanity check
# ----------------------------------------------------------------------------
def _conv2d_ref(x, w, b, stride, padding, pad_type):
    if padding:
        mode = {"zero": "constant", "reflect": "reflect", "replicate": "edge"}[pad_type]
        x = jnp.pad(x, ((0, 0), (0, 0), (padding, padding), (padding, padding)),
                    mode=mode)
    out = lax.conv_general_dilated(x, w, (stride, stride), "VALID",
                                   dimension_numbers=("NCHW", "OIHW", "NCHW"))
    return out + b.reshape(1, -1, 1, 1)


def _ms_image_dis_ref(scales_params, x, config):
    outs = []
    for layers in scales_params:
        h = x
        for (w, b) in layers[:-1]:
            h = _conv2d_ref(h, w, b, 2, 1, config["pad_type"])
            h = _act(h, config["activ"], 0.2)
        w3, b3 = layers[-1]
        outs.append(_conv2d_ref(h, w3, b3, 1, 0, config["pad_type"]))
        win, st = (1, 1, 3, 3), (1, 1, 2, 2)
        pad = ((0, 0), (0, 0), (1, 1), (1, 1))
        x = (lax.reduce_window(x, 0.0, lax.add, win, st, pad) /
             lax.reduce_window(jnp.ones_like(x), 0.0, lax.add, win, st, pad))
    return outs


# ----------------------------------------------------------------------------
if __name__ == "__main__":
    config = dict(n_layer=2, gan_type="lsgan", dim=8, norm="none", activ="lrelu",
                  num_scales=2, pad_type="reflect", input_dim=4)
    n_contrast = 2

    key = jax.random.PRNGKey(0)
    key, xkey = jax.random.split(key)
    x = jax.random.normal(xkey, (2, 4, 16, 16), jnp.float32)      # NCHW

    disc_params = []
    for _ in range(n_contrast):
        params, key = init_ms_image_dis_params(key, config)
        disc_params.append(params)

    fwd = jax.jit(lambda params, xx: mc_image_dis_forward(params, xx, 1, config))
    outs = fwd(disc_params, x)
    outs = jax.block_until_ready(outs)

    # expected multi-scale output shapes: (N, 1, H/4, W/4) per scale
    assert outs[0].shape == (2, 1, 4, 4)
    assert outs[1].shape == (2, 1, 2, 2)
    assert all(bool(jnp.all(jnp.isfinite(o))) for o in outs)

    # numerical check vs. pure-JAX reference (bf16 MXU vs f32 convs -> loose tol)
    refs = _ms_image_dis_ref(disc_params[1], x, config)
    for o, r in zip(outs, refs):
        np.testing.assert_allclose(np.asarray(o), np.asarray(r),
                                   atol=2e-2, rtol=5e-2)

    print("KERNEL_OK")
</pallas_src>

<mosaic_0001>
module attributes {stable_mosaic.version = 11 : i64} {
  func.func @_ms_dis_kernel(%arg0: i32, %arg1: memref<32x144xbf16, #tpu.memory_space<vmem>>, %arg2: memref<144x32xbf16, #tpu.memory_space<vmem>>, %arg3: memref<1x32xf32, #tpu.memory_space<vmem>>, %arg4: memref<288x16xbf16, #tpu.memory_space<vmem>>, %arg5: memref<1x16xf32, #tpu.memory_space<vmem>>, %arg6: memref<1x16xf32, #tpu.memory_space<vmem>>, %arg7: memref<1x1xf32, #tpu.memory_space<vmem>>, %arg8: memref<8x144xbf16, #tpu.memory_space<vmem>>, %arg9: memref<144x32xbf16, #tpu.memory_space<vmem>>, %arg10: memref<1x32xf32, #tpu.memory_space<vmem>>, %arg11: memref<288x16xbf16, #tpu.memory_space<vmem>>, %arg12: memref<1x16xf32, #tpu.memory_space<vmem>>, %arg13: memref<1x16xf32, #tpu.memory_space<vmem>>, %arg14: memref<1x1xf32, #tpu.memory_space<vmem>>, %arg15: memref<32x1xf32, #tpu.memory_space<vmem>>, %arg16: memref<8x1xf32, #tpu.memory_space<vmem>>) attributes {dimension_semantics = [#tpu.dimension_semantics<arbitrary>], iteration_bounds = array<i64: 1>, scalar_prefetch = 0 : i64, scratch_operands = 0 : i64, tpu.core_type = #tpu.core_type<tc>, window_params = [{pipeline_mode = #tpu.pipeline_mode<synchronous>, transform_indices = @transform_0, window_bounds = array<i64: 32, 144>}, {pipeline_mode = #tpu.pipeline_mode<synchronous>, transform_indices = @transform_1, window_bounds = array<i64: 144, 32>}, {pipeline_mode = #tpu.pipeline_mode<synchronous>, transform_indices = @transform_2, window_bounds = array<i64: 1, 32>}, {pipeline_mode = #tpu.pipeline_mode<synchronous>, transform_indices = @transform_3, window_bounds = array<i64: 288, 16>}, {pipeline_mode = #tpu.pipeline_mode<synchronous>, transform_indices = @transform_4, window_bounds = array<i64: 1, 16>}, {pipeline_mode = #tpu.pipeline_mode<synchronous>, transform_indices = @transform_5, window_bounds = array<i64: 1, 16>}, {pipeline_mode = #tpu.pipeline_mode<synchronous>, transform_indices = @transform_6, window_bounds = array<i64: 1, 1>}, {pipeline_mode = #tpu.pipeline_mode<synchronous>, transform_indices = @transform_7, window_bounds = array<i64: 8, 144>}, {pipeline_mode = #tpu.pipeline_mode<synchronous>, transform_indices = @transform_8, window_bounds = array<i64: 144, 32>}, {pipeline_mode = #tpu.pipeline_mode<synchronous>, transform_indices = @transform_9, window_bounds = array<i64: 1, 32>}, {pipeline_mode = #tpu.pipeline_mode<synchronous>, transform_indices = @transform_10, window_bounds = array<i64: 288, 16>}, {pipeline_mode = #tpu.pipeline_mode<synchronous>, transform_indices = @transform_11, window_bounds = array<i64: 1, 16>}, {pipeline_mode = #tpu.pipeline_mode<synchronous>, transform_indices = @transform_12, window_bounds = array<i64: 1, 16>}, {pipeline_mode = #tpu.pipeline_mode<synchronous>, transform_indices = @transform_13, window_bounds = array<i64: 1, 1>}, {pipeline_mode = #tpu.pipeline_mode<synchronous>, transform_indices = @transform_14, window_bounds = array<i64: 32, 1>}, {pipeline_mode = #tpu.pipeline_mode<synchronous>, transform_indices = @transform_15, window_bounds = array<i64: 8, 1>}]} {
    %c0 = arith.constant 0 : index
    %c0_0 = arith.constant 0 : index
    %0 = vector.load %arg1[%c0, %c0_0] : memref<32x144xbf16, #tpu.memory_space<vmem>>, vector<32x144xbf16>
    %c0_1 = arith.constant 0 : index
    %c0_2 = arith.constant 0 : index
    %1 = vector.load %arg2[%c0_1, %c0_2] : memref<144x32xbf16, #tpu.memory_space<vmem>>, vector<144x32xbf16>
    %cst = arith.constant dense<0.000000e+00> : vector<32x32xf32>
    %2 = tpu.matmul %0, %1, %cst {dimension_numbers = #tpu.dot_dimension_numbers<[1], [0], [0], [1], [0, 0, 1, 1], [], []>} : vector<32x144xbf16>, vector<144x32xbf16>, vector<32x32xf32> -> vector<32x32xf32>
    %c0_3 = arith.constant 0 : index
    %c0_4 = arith.constant 0 : index
    %3 = vector.load %arg3[%c0_3, %c0_4] : memref<1x32xf32, #tpu.memory_space<vmem>>, vector<1x32xf32>
    %4 = vector.broadcast %3 : vector<1x32xf32> to vector<32x32xf32>
    %5 = arith.addf %2, %4 : vector<32x32xf32>
    %cst_5 = arith.constant 2.000000e-01 : f32
    %6 = vector.broadcast %cst_5 : f32 to vector<32x32xf32>
    %7 = arith.mulf %6, %5 : vector<32x32xf32>
    %8 = arith.maximumf %5, %7 : vector<32x32xf32>
    %9 = vector.extract_strided_slice %8 {offsets = [0, 0], sizes = [4, 32], strides = [1, 1]} : vector<32x32xf32> to vector<4x32xf32>
    %10 = vector.extract_strided_slice %9 {offsets = [0, 0], sizes = [1, 32], strides = [1, 1]} : vector<4x32xf32> to vector<1x32xf32>
    %11 = vector.extract_strided_slice %9 {offsets = [3, 0], sizes = [1, 32], strides = [1, 1]} : vector<4x32xf32> to vector<1x32xf32>
    %12 = tpu.concatenate %10, %9, %11 in 0 : vector<1x32xf32>, vector<4x32xf32>, vector<1x32xf32> -> vector<6x32xf32>
    %13 = vector.extract_strided_slice %8 {offsets = [4, 0], sizes = [4, 32], strides = [1, 1]} : vector<32x32xf32> to vector<4x32xf32>
    %14 = vector.extract_strided_slice %13 {offsets = [0, 0], sizes = [1, 32], strides = [1, 1]} : vector<4x32xf32> to vector<1x32xf32>
    %15 = vector.extract_strided_slice %13 {offsets = [3, 0], sizes = [1, 32], strides = [1, 1]} : vector<4x32xf32> to vector<1x32xf32>
    %16 = tpu.concatenate %14, %13, %15 in 0 : vector<1x32xf32>, vector<4x32xf32>, vector<1x32xf32> -> vector<6x32xf32>
    %17 = vector.extract_strided_slice %8 {offsets = [8, 0], sizes = [4, 32], strides = [1, 1]} : vector<32x32xf32> to vector<4x32xf32>
    %18 = vector.extract_strided_slice %17 {offsets = [0, 0], sizes = [1, 32], strides = [1, 1]} : vector<4x32xf32> to vector<1x32xf32>
    %19 = vector.extract_strided_slice %17 {offsets = [3, 0], sizes = [1, 32], strides = [1, 1]} : vector<4x32xf32> to vector<1x32xf32>
    %20 = tpu.concatenate %18, %17, %19 in 0 : vector<1x32xf32>, vector<4x32xf32>, vector<1x32xf32> -> vector<6x32xf32>
    %21 = vector.extract_strided_slice %8 {offsets = [12, 0], sizes = [4, 32], strides = [1, 1]} : vector<32x32xf32> to vector<4x32xf32>
    %22 = vector.extract_strided_slice %21 {offsets = [0, 0], sizes = [1, 32], strides = [1, 1]} : vector<4x32xf32> to vector<1x32xf32>
    %23 = vector.extract_strided_slice %21 {offsets = [3, 0], sizes = [1, 32], strides = [1, 1]} : vector<4x32xf32> to vector<1x32xf32>
    %24 = tpu.concatenate %22, %21, %23 in 0 : vector<1x32xf32>, vector<4x32xf32>, vector<1x32xf32> -> vector<6x32xf32>
    %25 = vector.extract_strided_slice %8 {offsets = [16, 0], sizes = [4, 32], strides = [1, 1]} : vector<32x32xf32> to vector<4x32xf32>
    %26 = vector.extract_strided_slice %25 {offsets = [0, 0], sizes = [1, 32], strides = [1, 1]} : vector<4x32xf32> to vector<1x32xf32>
    %27 = vector.extract_strided_slice %25 {offsets = [3, 0], sizes = [1, 32], strides = [1, 1]} : vector<4x32xf32> to vector<1x32xf32>
    %28 = tpu.concatenate %26, %25, %27 in 0 : vector<1x32xf32>, vector<4x32xf32>, vector<1x32xf32> -> vector<6x32xf32>
    %29 = vector.extract_strided_slice %8 {offsets = [20, 0], sizes = [4, 32], strides = [1, 1]} : vector<32x32xf32> to vector<4x32xf32>
    %30 = vector.extract_strided_slice %29 {offsets = [0, 0], sizes = [1, 32], strides = [1, 1]} : vector<4x32xf32> to vector<1x32xf32>
    %31 = vector.extract_strided_slice %29 {offsets = [3, 0], sizes = [1, 32], strides = [1, 1]} : vector<4x32xf32> to vector<1x32xf32>
    %32 = tpu.concatenate %30, %29, %31 in 0 : vector<1x32xf32>, vector<4x32xf32>, vector<1x32xf32> -> vector<6x32xf32>
    %33 = vector.extract_strided_slice %8 {offsets = [24, 0], sizes = [4, 32], strides = [1, 1]} : vector<32x32xf32> to vector<4x32xf32>
    %34 = vector.extract_strided_slice %33 {offsets = [0, 0], sizes = [1, 32], strides = [1, 1]} : vector<4x32xf32> to vector<1x32xf32>
    %35 = vector.extract_strided_slice %33 {offsets = [3, 0], sizes = [1, 32], strides = [1, 1]} : vector<4x32xf32> to vector<1x32xf32>
    %36 = tpu.concatenate %34, %33, %35 in 0 : vector<1x32xf32>, vector<4x32xf32>, vector<1x32xf32> -> vector<6x32xf32>
    %37 = vector.extract_strided_slice %8 {offsets = [28, 0], sizes = [4, 32], strides = [1, 1]} : vector<32x32xf32> to vector<4x32xf32>
    %38 = vector.extract_strided_slice %37 {offsets = [0, 0], sizes = [1, 32], strides = [1, 1]} : vector<4x32xf32> to vector<1x32xf32>
    %39 = vector.extract_strided_slice %37 {offsets = [3, 0], sizes = [1, 32], strides = [1, 1]} : vector<4x32xf32> to vector<1x32xf32>
    %40 = tpu.concatenate %38, %37, %39 in 0 : vector<1x32xf32>, vector<4x32xf32>, vector<1x32xf32> -> vector<6x32xf32>
    %41 = vector.extract_strided_slice %12 {offsets = [0, 0], sizes = [4, 32], strides = [1, 1]} : vector<6x32xf32> to vector<4x32xf32>
    %42 = vector.extract_strided_slice %12 {offsets = [1, 0], sizes = [4, 32], strides = [1, 1]} : vector<6x32xf32> to vector<4x32xf32>
    %43 = vector.extract_strided_slice %12 {offsets = [2, 0], sizes = [4, 32], strides = [1, 1]} : vector<6x32xf32> to vector<4x32xf32>
    %44 = vector.extract_strided_slice %12 {offsets = [0, 0], sizes = [4, 32], strides = [1, 1]} : vector<6x32xf32> to vector<4x32xf32>
    %45 = vector.extract_strided_slice %12 {offsets = [1, 0], sizes = [4, 32], strides = [1, 1]} : vector<6x32xf32> to vector<4x32xf32>
    %46 = vector.extract_strided_slice %12 {offsets = [2, 0], sizes = [4, 32], strides = [1, 1]} : vector<6x32xf32> to vector<4x32xf32>
    %47 = vector.extract_strided_slice %16 {offsets = [0, 0], sizes = [4, 32], strides = [1, 1]} : vector<6x32xf32> to vector<4x32xf32>
    %48 = vector.extract_strided_slice %16 {offsets = [1, 0], sizes = [4, 32], strides = [1, 1]} : vector<6x32xf32> to vector<4x32xf32>
    %49 = vector.extract_strided_slice %16 {offsets = [2, 0], sizes = [4, 32], strides = [1, 1]} : vector<6x32xf32> to vector<4x32xf32>
    %50 = tpu.concatenate %41, %42, %43, %44, %45, %46, %47, %48, %49 in 1 : vector<4x32xf32>, vector<4x32xf32>, vector<4x32xf32>, vector<4x32xf32>, vector<4x32xf32>, vector<4x32xf32>, vector<4x32xf32>, vector<4x32xf32>, vector<4x32xf32> -> vector<4x288xf32>
    %51 = vector.extract_strided_slice %12 {offsets = [0, 0], sizes = [4, 32], strides = [1, 1]} : vector<6x32xf32> to vector<4x32xf32>
    %52 = vector.extract_strided_slice %12 {offsets = [1, 0], sizes = [4, 32], strides = [1, 1]} : vector<6x32xf32> to vector<4x32xf32>
    %53 = vector.extract_strided_slice %12 {offsets = [2, 0], sizes = [4, 32], strides = [1, 1]} : vector<6x32xf32> to vector<4x32xf32>
    %54 = vector.extract_strided_slice %16 {offsets = [0, 0], sizes = [4, 32], strides = [1, 1]} : vector<6x32xf32> to vector<4x32xf32>
    %55 = vector.extract_strided_slice %16 {offsets = [1, 0], sizes = [4, 32], strides = [1, 1]} : vector<6x32xf32> to vector<4x32xf32>
    %56 = vector.extract_strided_slice %16 {offsets = [2, 0], sizes = [4, 32], strides = [1, 1]} : vector<6x32xf32> to vector<4x32xf32>
    %57 = vector.extract_strided_slice %20 {offsets = [0, 0], sizes = [4, 32], strides = [1, 1]} : vector<6x32xf32> to vector<4x32xf32>
    %58 = vector.extract_strided_slice %20 {offsets = [1, 0], sizes = [4, 32], strides = [1, 1]} : vector<6x32xf32> to vector<4x32xf32>
    %59 = vector.extract_strided_slice %20 {offsets = [2, 0], sizes = [4, 32], strides = [1, 1]} : vector<6x32xf32> to vector<4x32xf32>
    %60 = tpu.concatenate %51, %52, %53, %54, %55, %56, %57, %58, %59 in 1 : vector<4x32xf32>, vector<4x32xf32>, vector<4x32xf32>, vector<4x32xf32>, vector<4x32xf32>, vector<4x32xf32>, vector<4x32xf32>, vector<4x32xf32>, vector<4x32xf32> -> vector<4x288xf32>
    %61 = vector.extract_strided_slice %16 {offsets = [0, 0], sizes = [4, 32], strides = [1, 1]} : vector<6x32xf32> to vector<4x32xf32>
    %62 = vector.extract_strided_slice %16 {offsets = [1, 0], sizes = [4, 32], strides = [1, 1]} : vector<6x32xf32> to vector<4x32xf32>
    %63 = vector.extract_strided_slice %16 {offsets = [2, 0], sizes = [4, 32], strides = [1, 1]} : vector<6x32xf32> to vector<4x32xf32>
    %64 = vector.extract_strided_slice %20 {offsets = [0, 0], sizes = [4, 32], strides = [1, 1]} : vector<6x32xf32> to vector<4x32xf32>
    %65 = vector.extract_strided_slice %20 {offsets = [1, 0], sizes = [4, 32], strides = [1, 1]} : vector<6x32xf32> to vector<4x32xf32>
    %66 = vector.extract_strided_slice %20 {offsets = [2, 0], sizes = [4, 32], strides = [1, 1]} : vector<6x32xf32> to vector<4x32xf32>
    %67 = vector.extract_strided_slice %24 {offsets = [0, 0], sizes = [4, 32], strides = [1, 1]} : vector<6x32xf32> to vector<4x32xf32>
    %68 = vector.extract_strided_slice %24 {offsets = [1, 0], sizes = [4, 32], strides = [1, 1]} : vector<6x32xf32> to vector<4x32xf32>
    %69 = vector.extract_strided_slice %24 {offsets = [2, 0], sizes = [4, 32], strides = [1, 1]} : vector<6x32xf32> to vector<4x32xf32>
    %70 = tpu.concatenate %61, %62, %63, %64, %65, %66, %67, %68, %69 in 1 : vector<4x32xf32>, vector<4x32xf32>, vector<4x32xf32>, vector<4x32xf32>, vector<4x32xf32>, vector<4x32xf32>, vector<4x32xf32>, vector<4x32xf32>, vector<4x32xf32> -> vector<4x288xf32>
    %71 = vector.extract_strided_slice %20 {offsets = [0, 0], sizes = [4, 32], strides = [1, 1]} : vector<6x32xf32> to vector<4x32xf32>
    %72 = vector.extract_strided_slice %20 {offsets = [1, 0], sizes = [4, 32], strides = [1, 1]} : vector<6x32xf32> to vector<4x32xf32>
    %73 = vector.extract_strided_slice %20 {offsets = [2, 0], sizes = [4, 32], strides = [1, 1]} : vector<6x32xf32> to vector<4x32xf32>
    %74 = vector.extract_strided_slice %24 {offsets = [0, 0], sizes = [4, 32], strides = [1, 1]} : vector<6x32xf32> to vector<4x32xf32>
    %75 = vector.extract_strided_slice %24 {offsets = [1, 0], sizes = [4, 32], strides = [1, 1]} : vector<6x32xf32> to vector<4x32xf32>
    %76 = vector.extract_strided_slice %24 {offsets = [2, 0], sizes = [4, 32], strides = [1, 1]} : vector<6x32xf32> to vector<4x32xf32>
    %77 = vector.extract_strided_slice %24 {offsets = [0, 0], sizes = [4, 32], strides = [1, 1]} : vector<6x32xf32> to vector<4x32xf32>
    %78 = vector.extract_strided_slice %24 {offsets = [1, 0], sizes = [4, 32], strides = [1, 1]} : vector<6x32xf32> to vector<4x32xf32>
    %79 = vector.extract_strided_slice %24 {offsets = [2, 0], sizes = [4, 32], strides = [1, 1]} : vector<6x32xf32> to vector<4x32xf32>
    %80 = tpu.concatenate %71, %72, %73, %74, %75, %76, %77, %78, %79 in 1 : vector<4x32xf32>, vector<4x32xf32>, vector<4x32xf32>, vector<4x32xf32>, vector<4x32xf32>, vector<4x32xf32>, vector<4x32xf32>, vector<4x32xf32>, vector<4x32xf32> -> vector<4x288xf32>
    %81 = vector.extract_strided_slice %28 {offsets = [0, 0], sizes = [4, 32], strides = [1, 1]} : vector<6x32xf32> to vector<4x32xf32>
    %82 = vector.extract_strided_slice %28 {offsets = [1, 0], sizes = [4, 32], strides = [1, 1]} : vector<6x32xf32> to vector<4x32xf32>
    %83 = vector.extract_strided_slice %28 {offsets = [2, 0], sizes = [4, 32], strides = [1, 1]} : vector<6x32xf32> to vector<4x32xf32>
    %84 = vector.extract_strided_slice %28 {offsets = [0, 0], sizes = [4, 32], strides = [1, 1]} : vector<6x32xf32> to vector<4x32xf32>
    %85 = vector.extract_strided_slice %28 {offsets = [1, 0], sizes = [4, 32], strides = [1, 1]} : vector<6x32xf32> to vector<4x32xf32>
    %86 = vector.extract_strided_slice %28 {offsets = [2, 0], sizes = [4, 32], strides = [1, 1]} : vector<6x32xf32> to vector<4x32xf32>
    %87 = vector.extract_strided_slice %32 {offsets = [0, 0], sizes = [4, 32], strides = [1, 1]} : vector<6x32xf32> to vector<4x32xf32>
    %88 = vector.extract_strided_slice %32 {offsets = [1, 0], sizes = [4, 32], strides = [1, 1]} : vector<6x32xf32> to vector<4x32xf32>
    %89 = vector.extract_strided_slice %32 {offsets = [2, 0], sizes = [4, 32], strides = [1, 1]} : vector<6x32xf32> to vector<4x32xf32>
    %90 = tpu.concatenate %81, %82, %83, %84, %85, %86, %87, %88, %89 in 1 : vector<4x32xf32>, vector<4x32xf32>, vector<4x32xf32>, vector<4x32xf32>, vector<4x32xf32>, vector<4x32xf32>, vector<4x32xf32>, vector<4x32xf32>, vector<4x32xf32> -> vector<4x288xf32>
    %91 = vector.extract_strided_slice %28 {offsets = [0, 0], sizes = [4, 32], strides = [1, 1]} : vector<6x32xf32> to vector<4x32xf32>
    %92 = vector.extract_strided_slice %28 {offsets = [1, 0], sizes = [4, 32], strides = [1, 1]} : vector<6x32xf32> to vector<4x32xf32>
    %93 = vector.extract_strided_slice %28 {offsets = [2, 0], sizes = [4, 32], strides = [1, 1]} : vector<6x32xf32> to vector<4x32xf32>
    %94 = vector.extract_strided_slice %32 {offsets = [0, 0], sizes = [4, 32], strides = [1, 1]} : vector<6x32xf32> to vector<4x32xf32>
    %95 = vector.extract_strided_slice %32 {offsets = [1, 0], sizes = [4, 32], strides = [1, 1]} : vector<6x32xf32> to vector<4x32xf32>
    %96 = vector.extract_strided_slice %32 {offsets = [2, 0], sizes = [4, 32], strides = [1, 1]} : vector<6x32xf32> to vector<4x32xf32>
    %97 = vector.extract_strided_slice %36 {offsets = [0, 0], sizes = [4, 32], strides = [1, 1]} : vector<6x32xf32> to vector<4x32xf32>
    %98 = vector.extract_strided_slice %36 {offsets = [1, 0], sizes = [4, 32], strides = [1, 1]} : vector<6x32xf32> to vector<4x32xf32>
    %99 = vector.extract_strided_slice %36 {offsets = [2, 0], sizes = [4, 32], strides = [1, 1]} : vector<6x32xf32> to vector<4x32xf32>
    %100 = tpu.concatenate %91, %92, %93, %94, %95, %96, %97, %98, %99 in 1 : vector<4x32xf32>, vector<4x32xf32>, vector<4x32xf32>, vector<4x32xf32>, vector<4x32xf32>, vector<4x32xf32>, vector<4x32xf32>, vector<4x32xf32>, vector<4x32xf32> -> vector<4x288xf32>
    %101 = vector.extract_strided_slice %32 {offsets = [0, 0], sizes = [4, 32], strides = [1, 1]} : vector<6x32xf32> to vector<4x32xf32>
    %102 = vector.extract_strided_slice %32 {offsets = [1, 0], sizes = [4, 32], strides = [1, 1]} : vector<6x32xf32> to vector<4x32xf32>
    %103 = vector.extract_strided_slice %32 {offsets = [2, 0], sizes = [4, 32], strides = [1, 1]} : vector<6x32xf32> to vector<4x32xf32>
    %104 = vector.extract_strided_slice %36 {offsets = [0, 0], sizes = [4, 32], strides = [1, 1]} : vector<6x32xf32> to vector<4x32xf32>
    %105 = vector.extract_strided_slice %36 {offsets = [1, 0], sizes = [4, 32], strides = [1, 1]} : vector<6x32xf32> to vector<4x32xf32>
    %106 = vector.extract_strided_slice %36 {offsets = [2, 0], sizes = [4, 32], strides = [1, 1]} : vector<6x32xf32> to vector<4x32xf32>
    %107 = vector.extract_strided_slice %40 {offsets = [0, 0], sizes = [4, 32], strides = [1, 1]} : vector<6x32xf32> to vector<4x32xf32>
    %108 = vector.extract_strided_slice %40 {offsets = [1, 0], sizes = [4, 32], strides = [1, 1]} : vector<6x32xf32> to vector<4x32xf32>
    %109 = vector.extract_strided_slice %40 {offsets = [2, 0], sizes = [4, 32], strides = [1, 1]} : vector<6x32xf32> to vector<4x32xf32>
    %110 = tpu.concatenate %101, %102, %103, %104, %105, %106, %107, %108, %109 in 1 : vector<4x32xf32>, vector<4x32xf32>, vector<4x32xf32>, vector<4x32xf32>, vector<4x32xf32>, vector<4x32xf32>, vector<4x32xf32>, vector<4x32xf32>, vector<4x32xf32> -> vector<4x288xf32>
    %111 = vector.extract_strided_slice %36 {offsets = [0, 0], sizes = [4, 32], strides = [1, 1]} : vector<6x32xf32> to vector<4x32xf32>
    %112 = vector.extract_strided_slice %36 {offsets = [1, 0], sizes = [4, 32], strides = [1, 1]} : vector<6x32xf32> to vector<4x32xf32>
    %113 = vector.extract_strided_slice %36 {offsets = [2, 0], sizes = [4, 32], strides = [1, 1]} : vector<6x32xf32> to vector<4x32xf32>
    %114 = vector.extract_strided_slice %40 {offsets = [0, 0], sizes = [4, 32], strides = [1, 1]} : vector<6x32xf32> to vector<4x32xf32>
    %115 = vector.extract_strided_slice %40 {offsets = [1, 0], sizes = [4, 32], strides = [1, 1]} : vector<6x32xf32> to vector<4x32xf32>
    %116 = vector.extract_strided_slice %40 {offsets = [2, 0], sizes = [4, 32], strides = [1, 1]} : vector<6x32xf32> to vector<4x32xf32>
    %117 = vector.extract_strided_slice %40 {offsets = [0, 0], sizes = [4, 32], strides = [1, 1]} : vector<6x32xf32> to vector<4x32xf32>
    %118 = vector.extract_strided_slice %40 {offsets = [1, 0], sizes = [4, 32], strides = [1, 1]} : vector<6x32xf32> to vector<4x32xf32>
    %119 = vector.extract_strided_slice %40 {offsets = [2, 0], sizes = [4, 32], strides = [1, 1]} : vector<6x32xf32> to vector<4x32xf32>
    %120 = tpu.concatenate %111, %112, %113, %114, %115, %116, %117, %118, %119 in 1 : vector<4x32xf32>, vector<4x32xf32>, vector<4x32xf32>, vector<4x32xf32>, vector<4x32xf32>, vector<4x32xf32>, vector<4x32xf32>, vector<4x32xf32>, vector<4x32xf32> -> vector<4x288xf32>
    %121 = tpu.concatenate %50, %60, %70, %80, %90, %100, %110, %120 in 0 : vector<4x288xf32>, vector<4x288xf32>, vector<4x288xf32>, vector<4x288xf32>, vector<4x288xf32>, vector<4x288xf32>, vector<4x288xf32>, vector<4x288xf32> -> vector<32x288xf32>
    %122 = arith.truncf %121 : vector<32x288xf32> to vector<32x288xbf16>
    %c0_6 = arith.constant 0 : index
    %c0_7 = arith.constant 0 : index
    %123 = vector.load %arg4[%c0_6, %c0_7] : memref<288x16xbf16, #tpu.memory_space<vmem>>, vector<288x16xbf16>
    %cst_8 = arith.constant dense<0.000000e+00> : vector<32x16xf32>
    %124 = tpu.matmul %122, %123, %cst_8 {dimension_numbers = #tpu.dot_dimension_numbers<[1], [0], [0], [1], [0, 0, 1, 1], [], []>} : vector<32x288xbf16>, vector<288x16xbf16>, vector<32x16xf32> -> vector<32x16xf32>
    %c0_9 = arith.constant 0 : index
    %c0_10 = arith.constant 0 : index
    %125 = vector.load %arg5[%c0_9, %c0_10] : memref<1x16xf32, #tpu.memory_space<vmem>>, vector<1x16xf32>
    %126 = vector.broadcast %125 : vector<1x16xf32> to vector<32x16xf32>
    %127 = arith.addf %124, %126 : vector<32x16xf32>
    %cst_11 = arith.constant 2.000000e-01 : f32
    %128 = vector.broadcast %cst_11 : f32 to vector<32x16xf32>
    %129 = arith.mulf %128, %127 : vector<32x16xf32>
    %130 = arith.maximumf %127, %129 : vector<32x16xf32>
    %c0_12 = arith.constant 0 : index
    %c0_13 = arith.constant 0 : index
    %131 = vector.load %arg6[%c0_12, %c0_13] : memref<1x16xf32, #tpu.memory_space<vmem>>, vector<1x16xf32>
    %132 = vector.broadcast %131 : vector<1x16xf32> to vector<32x16xf32>
    %133 = arith.mulf %130, %132 : vector<32x16xf32>
    %cst_14 = arith.constant dense<0.000000e+00> : vector<32xf32>
    %134 = vector.multi_reduction <add>, %133, %cst_14 [1] : vector<32x16xf32> to vector<32xf32>
    %135 = vector.shape_cast %134 : vector<32xf32> to vector<32x1xf32>
    %c0_15 = arith.constant 0 : index
    %c0_16 = arith.constant 0 : index
    %136 = vector.load %arg7[%c0_15, %c0_16] : memref<1x1xf32, #tpu.memory_space<vmem>>, vector<1x1xf32>
    %137 = vector.broadcast %136 : vector<1x1xf32> to vector<32x1xf32>
    %138 = arith.addf %135, %137 : vector<32x1xf32>
    %c0_17 = arith.constant 0 : index
    %c0_18 = arith.constant 0 : index
    %139 = vector.load %arg15[%c0_17, %c0_18] : memref<32x1xf32, #tpu.memory_space<vmem>>, vector<32x1xf32>
    tpu.vector_store %arg15[%c0_17, %c0_18], %138 {strides = array<i32>} : memref<32x1xf32, #tpu.memory_space<vmem>>, vector<32x1xf32>,
    %c0_19 = arith.constant 0 : index
    %c0_20 = arith.constant 0 : index
    %140 = vector.load %arg8[%c0_19, %c0_20] : memref<8x144xbf16, #tpu.memory_space<vmem>>, vector<8x144xbf16>
    %c0_21 = arith.constant 0 : index
    %c0_22 = arith.constant 0 : index
    %141 = vector.load %arg9[%c0_21, %c0_22] : memref<144x32xbf16, #tpu.memory_space<vmem>>, vector<144x32xbf16>
    %cst_23 = arith.constant dense<0.000000e+00> : vector<8x32xf32>
    %142 = tpu.matmul %140, %141, %cst_23 {dimension_numbers = #tpu.dot_dimension_numbers<[1], [0], [0], [1], [0, 0, 1, 1], [], []>} : vector<8x144xbf16>, vector<144x32xbf16>, vector<8x32xf32> -> vector<8x32xf32>
    %c0_24 = arith.constant 0 : index
    %c0_25 = arith.constant 0 : index
    %143 = vector.load %arg10[%c0_24, %c0_25] : memref<1x32xf32, #tpu.memory_space<vmem>>, vector<1x32xf32>
    %144 = vector.broadcast %143 : vector<1x32xf32> to vector<8x32xf32>
    %145 = arith.addf %142, %144 : vector<8x32xf32>
    %cst_26 = arith.constant 2.000000e-01 : f32
    %146 = vector.broadcast %cst_26 : f32 to vector<8x32xf32>
    %147 = arith.mulf %146, %145 : vector<8x32xf32>
    %148 = arith.maximumf %145, %147 : vector<8x32xf32>
    %149 = vector.extract_strided_slice %148 {offsets = [0, 0], sizes = [2, 32], strides = [1, 1]} : vector<8x32xf32> to vector<2x32xf32>
    %150 = vector.extract_strided_slice %149 {offsets = [0, 0], sizes = [1, 32], strides = [1, 1]} : vector<2x32xf32> to vector<1x32xf32>
    %151 = vector.extract_strided_slice %149 {offsets = [1, 0], sizes = [1, 32], strides = [1, 1]} : vector<2x32xf32> to vector<1x32xf32>
    %152 = tpu.concatenate %150, %149, %151 in 0 : vector<1x32xf32>, vector<2x32xf32>, vector<1x32xf32> -> vector<4x32xf32>
    %153 = vector.extract_strided_slice %148 {offsets = [2, 0], sizes = [2, 32], strides = [1, 1]} : vector<8x32xf32> to vector<2x32xf32>
    %154 = vector.extract_strided_slice %153 {offsets = [0, 0], sizes = [1, 32], strides = [1, 1]} : vector<2x32xf32> to vector<1x32xf32>
    %155 = vector.extract_strided_slice %153 {offsets = [1, 0], sizes = [1, 32], strides = [1, 1]} : vector<2x32xf32> to vector<1x32xf32>
    %156 = tpu.concatenate %154, %153, %155 in 0 : vector<1x32xf32>, vector<2x32xf32>, vector<1x32xf32> -> vector<4x32xf32>
    %157 = vector.extract_strided_slice %148 {offsets = [4, 0], sizes = [2, 32], strides = [1, 1]} : vector<8x32xf32> to vector<2x32xf32>
    %158 = vector.extract_strided_slice %157 {offsets = [0, 0], sizes = [1, 32], strides = [1, 1]} : vector<2x32xf32> to vector<1x32xf32>
    %159 = vector.extract_strided_slice %157 {offsets = [1, 0], sizes = [1, 32], strides = [1, 1]} : vector<2x32xf32> to vector<1x32xf32>
    %160 = tpu.concatenate %158, %157, %159 in 0 : vector<1x32xf32>, vector<2x32xf32>, vector<1x32xf32> -> vector<4x32xf32>
    %161 = vector.extract_strided_slice %148 {offsets = [6, 0], sizes = [2, 32], strides = [1, 1]} : vector<8x32xf32> to vector<2x32xf32>
    %162 = vector.extract_strided_slice %161 {offsets = [0, 0], sizes = [1, 32], strides = [1, 1]} : vector<2x32xf32> to vector<1x32xf32>
    %163 = vector.extract_strided_slice %161 {offsets = [1, 0], sizes = [1, 32], strides = [1, 1]} : vector<2x32xf32> to vector<1x32xf32>
    %164 = tpu.concatenate %162, %161, %163 in 0 : vector<1x32xf32>, vector<2x32xf32>, vector<1x32xf32> -> vector<4x32xf32>
    %165 = vector.extract_strided_slice %152 {offsets = [0, 0], sizes = [2, 32], strides = [1, 1]} : vector<4x32xf32> to vector<2x32xf32>
    %166 = vector.extract_strided_slice %152 {offsets = [1, 0], sizes = [2, 32], strides = [1, 1]} : vector<4x32xf32> to vector<2x32xf32>
    %167 = vector.extract_strided_slice %152 {offsets = [2, 0], sizes = [2, 32], strides = [1, 1]} : vector<4x32xf32> to vector<2x32xf32>
    %168 = vector.extract_strided_slice %152 {offsets = [0, 0], sizes = [2, 32], strides = [1, 1]} : vector<4x32xf32> to vector<2x32xf32>
    %169 = vector.extract_strided_slice %152 {offsets = [1, 0], sizes = [2, 32], strides = [1, 1]} : vector<4x32xf32> to vector<2x32xf32>
    %170 = vector.extract_strided_slice %152 {offsets = [2, 0], sizes = [2, 32], strides = [1, 1]} : vector<4x32xf32> to vector<2x32xf32>
    %171 = vector.extract_strided_slice %156 {offsets = [0, 0], sizes = [2, 32], strides = [1, 1]} : vector<4x32xf32> to vector<2x32xf32>
    %172 = vector.extract_strided_slice %156 {offsets = [1, 0], sizes = [2, 32], strides = [1, 1]} : vector<4x32xf32> to vector<2x32xf32>
    %173 = vector.extract_strided_slice %156 {offsets = [2, 0], sizes = [2, 32], strides = [1, 1]} : vector<4x32xf32> to vector<2x32xf32>
    %174 = tpu.concatenate %165, %166, %167, %168, %169, %170, %171, %172, %173 in 1 : vector<2x32xf32>, vector<2x32xf32>, vector<2x32xf32>, vector<2x32xf32>, vector<2x32xf32>, vector<2x32xf32>, vector<2x32xf32>, vector<2x32xf32>, vector<2x32xf32> -> vector<2x288xf32>
    %175 = vector.extract_strided_slice %152 {offsets = [0, 0], sizes = [2, 32], strides = [1, 1]} : vector<4x32xf32> to vector<2x32xf32>
    %176 = vector.extract_strided_slice %152 {offsets = [1, 0], sizes = [2, 32], strides = [1, 1]} : vector<4x32xf32> to vector<2x32xf32>
    %177 = vector.extract_strided_slice %152 {offsets = [2, 0], sizes = [2, 32], strides = [1, 1]} : vector<4x32xf32> to vector<2x32xf32>
    %178 = vector.extract_strided_slice %156 {offsets = [0, 0], sizes = [2, 32], strides = [1, 1]} : vector<4x32xf32> to vector<2x32xf32>
    %179 = vector.extract_strided_slice %156 {offsets = [1, 0], sizes = [2, 32], strides = [1, 1]} : vector<4x32xf32> to vector<2x32xf32>
    %180 = vector.extract_strided_slice %156 {offsets = [2, 0], sizes = [2, 32], strides = [1, 1]} : vector<4x32xf32> to vector<2x32xf32>
    %181 = vector.extract_strided_slice %156 {offsets = [0, 0], sizes = [2, 32], strides = [1, 1]} : vector<4x32xf32> to vector<2x32xf32>
    %182 = vector.extract_strided_slice %156 {offsets = [1, 0], sizes = [2, 32], strides = [1, 1]} : vector<4x32xf32> to vector<2x32xf32>
    %183 = vector.extract_strided_slice %156 {offsets = [2, 0], sizes = [2, 32], strides = [1, 1]} : vector<4x32xf32> to vector<2x32xf32>
    %184 = tpu.concatenate %175, %176, %177, %178, %179, %180, %181, %182, %183 in 1 : vector<2x32xf32>, vector<2x32xf32>, vector<2x32xf32>, vector<2x32xf32>, vector<2x32xf32>, vector<2x32xf32>, vector<2x32xf32>, vector<2x32xf32>, vector<2x32xf32> -> vector<2x288xf32>
    %185 = vector.extract_strided_slice %160 {offsets = [0, 0], sizes = [2, 32], strides = [1, 1]} : vector<4x32xf32> to vector<2x32xf32>
    %186 = vector.extract_strided_slice %160 {offsets = [1, 0], sizes = [2, 32], strides = [1, 1]} : vector<4x32xf32> to vector<2x32xf32>
    %187 = vector.extract_strided_slice %160 {offsets = [2, 0], sizes = [2, 32], strides = [1, 1]} : vector<4x32xf32> to vector<2x32xf32>
    %188 = vector.extract_strided_slice %160 {offsets = [0, 0], sizes = [2, 32], strides = [1, 1]} : vector<4x32xf32> to vector<2x32xf32>
    %189 = vector.extract_strided_slice %160 {offsets = [1, 0], sizes = [2, 32], strides = [1, 1]} : vector<4x32xf32> to vector<2x32xf32>
    %190 = vector.extract_strided_slice %160 {offsets = [2, 0], sizes = [2, 32], strides = [1, 1]} : vector<4x32xf32> to vector<2x32xf32>
    %191 = vector.extract_strided_slice %164 {offsets = [0, 0], sizes = [2, 32], strides = [1, 1]} : vector<4x32xf32> to vector<2x32xf32>
    %192 = vector.extract_strided_slice %164 {offsets = [1, 0], sizes = [2, 32], strides = [1, 1]} : vector<4x32xf32> to vector<2x32xf32>
    %193 = vector.extract_strided_slice %164 {offsets = [2, 0], sizes = [2, 32], strides = [1, 1]} : vector<4x32xf32> to vector<2x32xf32>
    %194 = tpu.concatenate %185, %186, %187, %188, %189, %190, %191, %192, %193 in 1 : vector<2x32xf32>, vector<2x32xf32>, vector<2x32xf32>, vector<2x32xf32>, vector<2x32xf32>, vector<2x32xf32>, vector<2x32xf32>, vector<2x32xf32>, vector<2x32xf32> -> vector<2x288xf32>
    %195 = vector.extract_strided_slice %160 {offsets = [0, 0], sizes = [2, 32], strides = [1, 1]} : vector<4x32xf32> to vector<2x32xf32>
    %196 = vector.extract_strided_slice %160 {offsets = [1, 0], sizes = [2, 32], strides = [1, 1]} : vector<4x32xf32> to vector<2x32xf32>
    %197 = vector.extract_strided_slice %160 {offsets = [2, 0], sizes = [2, 32], strides = [1, 1]} : vector<4x32xf32> to vector<2x32xf32>
    %198 = vector.extract_strided_slice %164 {offsets = [0, 0], sizes = [2, 32], strides = [1, 1]} : vector<4x32xf32> to vector<2x32xf32>
    %199 = vector.extract_strided_slice %164 {offsets = [1, 0], sizes = [2, 32], strides = [1, 1]} : vector<4x32xf32> to vector<2x32xf32>
    %200 = vector.extract_strided_slice %164 {offsets = [2, 0], sizes = [2, 32], strides = [1, 1]} : vector<4x32xf32> to vector<2x32xf32>
    %201 = vector.extract_strided_slice %164 {offsets = [0, 0], sizes = [2, 32], strides = [1, 1]} : vector<4x32xf32> to vector<2x32xf32>
    %202 = vector.extract_strided_slice %164 {offsets = [1, 0], sizes = [2, 32], strides = [1, 1]} : vector<4x32xf32> to vector<2x32xf32>
    %203 = vector.extract_strided_slice %164 {offsets = [2, 0], sizes = [2, 32], strides = [1, 1]} : vector<4x32xf32> to vector<2x32xf32>
    %204 = tpu.concatenate %195, %196, %197, %198, %199, %200, %201, %202, %203 in 1 : vector<2x32xf32>, vector<2x32xf32>, vector<2x32xf32>, vector<2x32xf32>, vector<2x32xf32>, vector<2x32xf32>, vector<2x32xf32>, vector<2x32xf32>, vector<2x32xf32> -> vector<2x288xf32>
    %205 = tpu.concatenate %174, %184, %194, %204 in 0 : vector<2x288xf32>, vector<2x288xf32>, vector<2x288xf32>, vector<2x288xf32> -> vector<8x288xf32>
    %206 = arith.truncf %205 : vector<8x288xf32> to vector<8x288xbf16>
    %c0_27 = arith.constant 0 : index
    %c0_28 = arith.constant 0 : index
    %207 = vector.load %arg11[%c0_27, %c0_28] : memref<288x16xbf16, #tpu.memory_space<vmem>>, vector<288x16xbf16>
    %cst_29 = arith.constant dense<0.000000e+00> : vector<8x16xf32>
    %208 = tpu.matmul %206, %207, %cst_29 {dimension_numbers = #tpu.dot_dimension_numbers<[1], [0], [0], [1], [0, 0, 1, 1], [], []>} : vector<8x288xbf16>, vector<288x16xbf16>, vector<8x16xf32> -> vector<8x16xf32>
    %c0_30 = arith.constant 0 : index
    %c0_31 = arith.constant 0 : index
    %209 = vector.load %arg12[%c0_30, %c0_31] : memref<1x16xf32, #tpu.memory_space<vmem>>, vector<1x16xf32>
    %210 = vector.broadcast %209 : vector<1x16xf32> to vector<8x16xf32>
    %211 = arith.addf %208, %210 : vector<8x16xf32>
    %cst_32 = arith.constant 2.000000e-01 : f32
    %212 = vector.broadcast %cst_32 : f32 to vector<8x16xf32>
    %213 = arith.mulf %212, %211 : vector<8x16xf32>
    %214 = arith.maximumf %211, %213 : vector<8x16xf32>
    %c0_33 = arith.constant 0 : index
    %c0_34 = arith.constant 0 : index
    %215 = vector.load %arg13[%c0_33, %c0_34] : memref<1x16xf32, #tpu.memory_space<vmem>>, vector<1x16xf32>
    %216 = vector.broadcast %215 : vector<1x16xf32> to vector<8x16xf32>
    %217 = arith.mulf %214, %216 : vector<8x16xf32>
    %cst_35 = arith.constant dense<0.000000e+00> : vector<8xf32>
    %218 = vector.multi_reduction <add>, %217, %cst_35 [1] : vector<8x16xf32> to vector<8xf32>
    %219 = vector.shape_cast %218 : vector<8xf32> to vector<8x1xf32>
    %c0_36 = arith.constant 0 : index
    %c0_37 = arith.constant 0 : index
    %220 = vector.load %arg14[%c0_36, %c0_37] : memref<1x1xf32, #tpu.memory_space<vmem>>, vector<1x1xf32>
    %221 = vector.broadcast %220 : vector<1x1xf32> to vector<8x1xf32>
    %222 = arith.addf %219, %221 : vector<8x1xf32>
    %c0_38 = arith.constant 0 : index
    %c0_39 = arith.constant 0 : index
    %223 = vector.load %arg16[%c0_38, %c0_39] : memref<8x1xf32, #tpu.memory_space<vmem>>, vector<8x1xf32>
    tpu.vector_store %arg16[%c0_38, %c0_39], %222 {strides = array<i32>} : memref<8x1xf32, #tpu.memory_space<vmem>>, vector<8x1xf32>,
    return
  }
  func.func @transform_0(%arg0: i32) -> (i32, i32) {
    %c0_i32 = arith.constant 0 : i32
    %c0_i32_0 = arith.constant 0 : i32
    %c0_i32_1 = arith.constant 0 : i32
    return %c0_i32, %c0_i32_0 : i32, i32
  }
  func.func @transform_1(%arg0: i32) -> (i32, i32) {
    %c0_i32 = arith.constant 0 : i32
    %c0_i32_0 = arith.constant 0 : i32
    %c0_i32_1 = arith.constant 0 : i32
    return %c0_i32, %c0_i32_0 : i32, i32
  }
  func.func @transform_2(%arg0: i32) -> (i32, i32) {
    %c0_i32 = arith.constant 0 : i32
    %c0_i32_0 = arith.constant 0 : i32
    %c0_i32_1 = arith.constant 0 : i32
    return %c0_i32, %c0_i32_0 : i32, i32
  }
  func.func @transform_3(%arg0: i32) -> (i32, i32) {
    %c0_i32 = arith.constant 0 : i32
    %c0_i32_0 = arith.constant 0 : i32
    %c0_i32_1 = arith.constant 0 : i32
    return %c0_i32, %c0_i32_0 : i32, i32
  }
  func.func @transform_4(%arg0: i32) -> (i32, i32) {
    %c0_i32 = arith.constant 0 : i32
    %c0_i32_0 = arith.constant 0 : i32
    %c0_i32_1 = arith.constant 0 : i32
    return %c0_i32, %c0_i32_0 : i32, i32
  }
  func.func @transform_5(%arg0: i32) -> (i32, i32) {
    %c0_i32 = arith.constant 0 : i32
    %c0_i32_0 = arith.constant 0 : i32
    %c0_i32_1 = arith.constant 0 : i32
    return %c0_i32, %c0_i32_0 : i32, i32
  }
  func.func @transform_6(%arg0: i32) -> (i32, i32) {
    %c0_i32 = arith.constant 0 : i32
    %c0_i32_0 = arith.constant 0 : i32
    %c0_i32_1 = arith.constant 0 : i32
    return %c0_i32, %c0_i32_0 : i32, i32
  }
  func.func @transform_7(%arg0: i32) -> (i32, i32) {
    %c0_i32 = arith.constant 0 : i32
    %c0_i32_0 = arith.constant 0 : i32
    %c0_i32_1 = arith.constant 0 : i32
    return %c0_i32, %c0_i32_0 : i32, i32
  }
  func.func @transform_8(%arg0: i32) -> (i32, i32) {
    %c0_i32 = arith.constant 0 : i32
    %c0_i32_0 = arith.constant 0 : i32
    %c0_i32_1 = arith.constant 0 : i32
    return %c0_i32, %c0_i32_0 : i32, i32
  }
  func.func @transform_9(%arg0: i32) -> (i32, i32) {
    %c0_i32 = arith.constant 0 : i32
    %c0_i32_0 = arith.constant 0 : i32
    %c0_i32_1 = arith.constant 0 : i32
    return %c0_i32, %c0_i32_0 : i32, i32
  }
  func.func @transform_10(%arg0: i32) -> (i32, i32) {
    %c0_i32 = arith.constant 0 : i32
    %c0_i32_0 = arith.constant 0 : i32
    %c0_i32_1 = arith.constant 0 : i32
    return %c0_i32, %c0_i32_0 : i32, i32
  }
  func.func @transform_11(%arg0: i32) -> (i32, i32) {
    %c0_i32 = arith.constant 0 : i32
    %c0_i32_0 = arith.constant 0 : i32
    %c0_i32_1 = arith.constant 0 : i32
    return %c0_i32, %c0_i32_0 : i32, i32
  }
  func.func @transform_12(%arg0: i32) -> (i32, i32) {
    %c0_i32 = arith.constant 0 : i32
    %c0_i32_0 = arith.constant 0 : i32
    %c0_i32_1 = arith.constant 0 : i32
    return %c0_i32, %c0_i32_0 : i32, i32
  }
  func.func @transform_13(%arg0: i32) -> (i32, i32) {
    %c0_i32 = arith.constant 0 : i32
    %c0_i32_0 = arith.constant 0 : i32
    %c0_i32_1 = arith.constant 0 : i32
    return %c0_i32, %c0_i32_0 : i32, i32
  }
  func.func @transform_14(%arg0: i32) -> (i32, i32) {
    %c0_i32 = arith.constant 0 : i32
    %c0_i32_0 = arith.constant 0 : i32
    %c0_i32_1 = arith.constant 0 : i32
    return %c0_i32, %c0_i32_0 : i32, i32
  }
  func.func @transform_15(%arg0: i32) -> (i32, i32) {
    %c0_i32 = arith.constant 0 : i32
    %c0_i32_0 = arith.constant 0 : i32
    %c0_i32_1 = arith.constant 0 : i32
    return %c0_i32, %c0_i32_0 : i32, i32
  }
}

</mosaic_0001>

<llo_original>
// kernel: tile.13
$region0: #{tile.13}
  #allocation0 [shape = 's32[1]{0}', space=sflag, size = 0x4, scoped, tag = 'scoped memory for tile.13']
  %s0 = inlined_call_operand.vmem [shape: f32[8], index: 0, kind: input, shape index: {}]
  %s1 = inlined_call_operand.vmem [shape: f32[4,8], index: 1, kind: output, shape index: {}]
  // Predicated region
  $region2: #{tile.13} parent=0 // pred_check
    _
  $region3: #{tile.13} parent=0 // pred_check_branch
    %3 = sbr.rel (0) target = $region5
  $region4: #{tile.13} parent=0 // pred_region
    _
  $region5: #{tile.13} parent=0 // pred_fallthru
    _
  %v4 = vld [vmem:[%s0] ss:$0 sm:$0xff]
  %5 = vst [vmem:[%s1] sm:$0xf] %v4

// kernel: tile.14
$region0: #{tile.14}
  %s0 = inlined_call_operand.vmem [shape: f32[4,8], index: 0, kind: input, shape index: {}]
  %s1 = inlined_call_operand.vmem [shape: f32[1,32], index: 1, kind: output, shape index: {}]
  $region1: #{tile.14} parent=0
    #allocation0 [shape = 'u8[4096]{0}', space=vmem, size = 0x1000, scoped, tag = 'scoped mem for output reshape']
    #allocation1 [shape = 'u8[4096]{0}', space=vmem, size = 0x1000, scoped, tag = 'scoped mem for input reshape']
    %s3 = sshll.u32 1, 4
    %s4 = ssub.s32 %s3, 1
    %v5 = vld [vmem:[%s0] sm:%s4]
    %6 = vst [vmem:[#allocation1] sm:%s4] %v5
    %v7 = vld [vmem:[#allocation1] sm:$0x1]
    %vm8 = vcmask 64512
    %9 = vst.msk [vmem:[#allocation0] sm:$0x1] %vm8, %v7
    %s10 = scalar_lea.vmem [#allocation1], 3
    %v11 = vld [vmem:[%s10] sm:$0x1]
    %12 = vrot.lane.b32.xlu0 %v11, 24
    %v13 = vpop.permute.xlu0 %12
    %vm14 = vcmask 261312
    %15 = vst.msk [vmem:[#allocation0] sm:$0x1] %vm14, %v13
    %s16 = scalar_lea.vmem [#allocation1], 2
    %v17 = vld [vmem:[%s16] sm:$0x1]
    %18 = vrot.lane.b32.xlu0 %v17, 16
    %v19 = vpop.permute.xlu0 %18
    %vm20 = vcmask 195712
    %21 = vst.msk [vmem:[#allocation0] sm:$0x1] %vm20, %v19
    %s22 = scalar_lea.vmem [#allocation1], 1
    %v23 = vld [vmem:[%s22] sm:$0x1]
    %24 = vrot.lane.b32.xlu0 %v23, 8
    %v25 = vpop.permute.xlu0 %24
    %vm26 = vcmask 130112
    %27 = vst.msk [vmem:[#allocation0] sm:$0x1] %vm26, %v25
    %s29 = sshll.u32 1, 1
    %s30 = ssub.s32 %s29, 1
    %v32 = vld [vmem:[#allocation0] sm:%s30]
    %s33 = sshll.u32 1, 1
    %s34 = ssub.s32 %s33, 1
    %35 = vst [vmem:[%s1] sm:%s34] %v32

// kernel: _lambda_.1
$region0: #{_lambda_.1}
  #allocation0 [shape = 'u32[]', space=smem, size = 0x4, offset = 0x4, fixed_abs, tag = 'smem constant byte address 0x4 - core index']
  #allocation1 [shape = 'u32[144,128]{1,0:T(1,128)}', space=vmem, size = 0x12000, scoped, tag = 'internal scratch']
  #allocation2 [shape = 'f32[1,1]{1,0:T(1,128)S(1)}', space=vmem, size = 0x200, scoped, tag = 'scoped memory for _lambda_.1']
  #allocation3 [shape = 'f32[1,1]{1,0:T(1,128)S(1)}', space=vmem, size = 0x200, scoped, tag = 'scoped memory for _lambda_.1']
  %s0 = inlined_call_operand.vmem [shape: bf16[32,144], index: 0, kind: input, shape index: {}]
  %s1 = inlined_call_operand.vmem [shape: bf16[144,32], index: 1, kind: input, shape index: {}]
  %s2 = inlined_call_operand.vmem [shape: f32[1,32], index: 2, kind: input, shape index: {}]
  %s3 = inlined_call_operand.vmem [shape: bf16[288,16], index: 3, kind: input, shape index: {}]
  %s4 = inlined_call_operand.vmem [shape: f32[1,16], index: 4, kind: input, shape index: {}]
  %s5 = inlined_call_operand.vmem [shape: f32[1,16], index: 5, kind: input, shape index: {}]
  %s6 = inlined_call_operand.<no memory space> [shape: f32[1,1], index: 6, kind: input, shape index: {}]
  %s7 = inlined_call_operand.vmem [shape: bf16[8,144], index: 7, kind: input, shape index: {}]
  %s8 = inlined_call_operand.vmem [shape: bf16[144,32], index: 8, kind: input, shape index: {}]
  %s9 = inlined_call_operand.vmem [shape: f32[1,32], index: 9, kind: input, shape index: {}]
  %s10 = inlined_call_operand.vmem [shape: bf16[288,16], index: 10, kind: input, shape index: {}]
  %s11 = inlined_call_operand.vmem [shape: f32[1,16], index: 11, kind: input, shape index: {}]
  %s12 = inlined_call_operand.vmem [shape: f32[1,16], index: 12, kind: input, shape index: {}]
  %s13 = inlined_call_operand.<no memory space> [shape: f32[1,1], index: 13, kind: input, shape index: {}]
  %s14 = inlined_call_operand.vmem [shape: f32[32,1], index: 14, kind: output, shape index: {0}]
  %s15 = inlined_call_operand.vmem [shape: f32[8,1], index: 15, kind: output, shape index: {1}]
  %16 = xla_tuple %s14, %s15
  %s17 = sld [smem:[#allocation0]]
  $region74: #{_lambda_.1} parent=0
    _
  %s19 = ssub.s32 1, %s17
  %s20 = scalar_select 0, %s19, %s17
  %v21 = vstv %s6
  %22 = vst [vmem:[#allocation2] sm:$0x1] %v21
  %v23 = vstv %s13
  %24 = vst [vmem:[#allocation3] sm:$0x1] %v23
  // Predicated region
  $region2: #{_lambda_.1} parent=0 // pred_check
    _
  $region3: #{_lambda_.1} parent=0 // pred_check_branch
    %26 = sbr.rel (0) target = $region5
  $region4: #{_lambda_.1} parent=0 // pred_region
    _
  $region5: #{_lambda_.1} parent=0 // pred_fallthru
    _
  // Predicated region
  $region6: #{_lambda_.1} parent=0 // pred_check
    _
  $region7: #{_lambda_.1} parent=0 // pred_check_branch
    %28 = sbr.rel (0) target = $region9
  $region8: #{_lambda_.1} parent=0 // pred_region
    _
  $region9: #{_lambda_.1} parent=0 // pred_fallthru
    _
  // Predicated region
  $region10: #{_lambda_.1} parent=0 // pred_check
    _
  $region11: #{_lambda_.1} parent=0 // pred_check_branch
    %30 = sbr.rel (0) target = $region13
  $region12: #{_lambda_.1} parent=0 // pred_region
    _
  $region13: #{_lambda_.1} parent=0 // pred_fallthru
    _
  // Predicated region
  $region14: #{_lambda_.1} parent=0 // pred_check
    _
  $region15: #{_lambda_.1} parent=0 // pred_check_branch
    %32 = sbr.rel (0) target = $region17
  $region16: #{_lambda_.1} parent=0 // pred_region
    _
  $region17: #{_lambda_.1} parent=0 // pred_fallthru
    _
  // Predicated region
  $region18: #{_lambda_.1} parent=0 // pred_check
    _
  $region19: #{_lambda_.1} parent=0 // pred_check_branch
    %34 = sbr.rel (0) target = $region21
  $region20: #{_lambda_.1} parent=0 // pred_region
    _
  $region21: #{_lambda_.1} parent=0 // pred_fallthru
    _
  // Predicated region
  $region22: #{_lambda_.1} parent=0 // pred_check
    _
  $region23: #{_lambda_.1} parent=0 // pred_check_branch
    %36 = sbr.rel (0) target = $region25
  $region24: #{_lambda_.1} parent=0 // pred_region
    _
  $region25: #{_lambda_.1} parent=0 // pred_fallthru
    _
  // Predicated region
  $region26: #{_lambda_.1} parent=0 // pred_check
    _
  $region27: #{_lambda_.1} parent=0 // pred_check_branch
    %38 = sbr.rel (0) target = $region29
  $region28: #{_lambda_.1} parent=0 // pred_region
    _
  $region29: #{_lambda_.1} parent=0 // pred_fallthru
    _
  // Predicated region
  $region30: #{_lambda_.1} parent=0 // pred_check
    _
  $region31: #{_lambda_.1} parent=0 // pred_check_branch
    %40 = sbr.rel (0) target = $region33
  $region32: #{_lambda_.1} parent=0 // pred_region
    _
  $region33: #{_lambda_.1} parent=0 // pred_fallthru
    _
  // Predicated region
  $region34: #{_lambda_.1} parent=0 // pred_check
    _
  $region35: #{_lambda_.1} parent=0 // pred_check_branch
    %42 = sbr.rel (0) target = $region37
  $region36: #{_lambda_.1} parent=0 // pred_region
    _
  $region37: #{_lambda_.1} parent=0 // pred_fallthru
    _
  // Predicated region
  $region38: #{_lambda_.1} parent=0 // pred_check
    _
  $region39: #{_lambda_.1} parent=0 // pred_check_branch
    %44 = sbr.rel (0) target = $region41
  $region40: #{_lambda_.1} parent=0 // pred_region
    _
  $region41: #{_lambda_.1} parent=0 // pred_fallthru
    _
  // Predicated region
  $region42: #{_lambda_.1} parent=0 // pred_check
    _
  $region43: #{_lambda_.1} parent=0 // pred_check_branch
    %46 = sbr.rel (0) target = $region45
  $region44: #{_lambda_.1} parent=0 // pred_region
    _
  $region45: #{_lambda_.1} parent=0 // pred_fallthru
    _
  // Predicated region
  $region46: #{_lambda_.1} parent=0 // pred_check
    _
  $region47: #{_lambda_.1} parent=0 // pred_check_branch
    %48 = sbr.rel (0) target = $region49
  $region48: #{_lambda_.1} parent=0 // pred_region
    _
  $region49: #{_lambda_.1} parent=0 // pred_fallthru
    _
  // Predicated region
  $region50: #{_lambda_.1} parent=0 // pred_check
    _
  $region51: #{_lambda_.1} parent=0 // pred_check_branch
    %50 = sbr.rel (0) target = $region53
  $region52: #{_lambda_.1} parent=0 // pred_region
    _
  $region53: #{_lambda_.1} parent=0 // pred_fallthru
    _
  // Predicated region
  $region54: #{_lambda_.1} parent=0 // pred_check
    _
  $region55: #{_lambda_.1} parent=0 // pred_check_branch
    %52 = sbr.rel (0) target = $region57
  $region56: #{_lambda_.1} parent=0 // pred_region
    _
  $region57: #{_lambda_.1} parent=0 // pred_fallthru
    _
  %v54 = vld [vmem:[%s0] sm:$0xff]
  %v55 = vld [vmem:[%s0 + $0x8] sm:$0xff]
  %v56 = vld [vmem:[%s0 + $0x10] sm:$0xff]
  %v57 = vld [vmem:[%s0 + $0x18] sm:$0xff]
  %v58 = vld [vmem:[%s1] sm:$0xf]
  %v59 = vld [vmem:[%s1 + $0x4] sm:$0xf]
  %v60 = vld [vmem:[%s1 + $0x8] sm:$0xf]
  %v61 = vld [vmem:[%s1 + $0xc] sm:$0xf]
  %v62 = vld [vmem:[%s1 + $0x10] sm:$0xf]
  %v63 = vld [vmem:[%s1 + $0x14] sm:$0xf]
  %v64 = vld [vmem:[%s1 + $0x18] sm:$0xf]
  %v65 = vld [vmem:[%s1 + $0x1c] sm:$0xf]
  %v66 = vld [vmem:[%s1 + $0x20] sm:$0xf]
  %v67 = vld [vmem:[%s1 + $0x24] sm:$0xf]
  %v68 = vld [vmem:[%s1 + $0x28] sm:$0xf]
  %v69 = vld [vmem:[%s1 + $0x2c] sm:$0xf]
  %v70 = vld [vmem:[%s1 + $0x30] sm:$0xf]
  %v71 = vld [vmem:[%s1 + $0x34] sm:$0xf]
  %v72 = vld [vmem:[%s1 + $0x38] sm:$0xf]
  %v73 = vld [vmem:[%s1 + $0x3c] sm:$0xf]
  %v74 = vld [vmem:[%s1 + $0x40] sm:$0xf]
  %v75 = vld [vmem:[%s1 + $0x44] sm:$0xf]
  %v76 = vld [vmem:[%s2] sm:$0x1]
  %v78 = vlaneseq
  %v79 = vshrl.u32 %v78, 7
  %v80 = vsub.s32 0, %v79
  %v81 = vrot.slane %v76, %v80
  %v87 = vunpack.c.l.b16 %v54
  %v88 = vunpack.c.h.b16 %v54
  %v89 = vunpack.c.l.b16 %v55
  %v90 = vunpack.c.h.b16 %v55
  %v91 = vunpack.c.l.b16 %v56
  %v92 = vunpack.c.h.b16 %v56
  %v93 = vunpack.c.l.b16 %v57
  %v94 = vunpack.c.h.b16 %v57
  %v95 = vpack.c.b16 %v89, %v87
  %v96 = vpack.c.b16 %v90, %v88
  %v97 = vpack.c.b16 %v93, %v91
  %v98 = vpack.c.b16 %v94, %v92
  %v119 = vunpack.c.l.b16 %v58
  %v120 = vunpack.c.l.b16 %v59
  %v121 = vunpack.c.l.b16 %v60
  %v122 = vunpack.c.l.b16 %v61
  %v123 = vunpack.c.l.b16 %v62
  %v124 = vunpack.c.l.b16 %v63
  %v125 = vunpack.c.l.b16 %v64
  %v126 = vunpack.c.l.b16 %v65
  %v127 = vunpack.c.l.b16 %v66
  %v128 = vunpack.c.l.b16 %v67
  %v129 = vunpack.c.l.b16 %v68
  %v130 = vunpack.c.l.b16 %v69
  %v131 = vunpack.c.l.b16 %v70
  %v132 = vunpack.c.l.b16 %v71
  %v133 = vunpack.c.l.b16 %v72
  %v134 = vunpack.c.l.b16 %v73
  %v135 = vunpack.c.l.b16 %v74
  %v136 = vunpack.c.l.b16 %v75
  %v137 = vpack.c.b16 %v120, %v119
  %v138 = vpack.c.b16 %v122, %v121
  %v139 = vpack.c.b16 %v124, %v123
  %v140 = vpack.c.b16 %v126, %v125
  %v141 = vpack.c.b16 %v128, %v127
  %v142 = vpack.c.b16 %v130, %v129
  %v143 = vpack.c.b16 %v132, %v131
  %v144 = vpack.c.b16 %v134, %v133
  %v145 = vpack.c.b16 %v136, %v135
  %vm155 = vcmask 130048
  %v157 = vsel %vm155, %v96, 0
  %v160 = vsel %vm155, %v98, 0
  %162 = vmatprep.subr.bf16.mxu0 0
  %163 = vmatpush1.bf16.msra.mxu0 %v144
  %164 = vmatprep.subr.bf16.mxu0 0
  %165 = vmatpush1.bf16.msra.mxu0 %v143
  %166 = vmatprep.subr.bf16.mxu0 0
  %167 = vmatpush1.bf16.msra.mxu0 %v142
  %168 = vmatprep.subr.bf16.mxu0 0
  %169 = vmatpush1.bf16.msra.mxu0 %v141
  %170 = vmatprep.subr.bf16.mxu0 0
  %171 = vmatpush1.bf16.msra.mxu0 %v140
  %172 = vmatprep.subr.bf16.mxu0 0
  %173 = vmatpush1.bf16.msra.mxu0 %v139
  %174 = vmatprep.subr.bf16.mxu0 0
  %175 = vmatpush1.bf16.msra.mxu0 %v138
  %176 = vmatprep.subr.bf16.mxu0 0
  %177 = vmatpush1.bf16.msra.mxu0 %v137
  %178 = vmatprep.subr.bf16.mxu0 0
  %179 = vmatpush2.bf16.msra.mxu0 0
  %180 = vmatprep.subr.bf16.mxu0 0
  %181 = vmatpush2.bf16.msra.mxu0 0
  %182 = vmatprep.subr.bf16.mxu0 0
  %183 = vmatpush2.bf16.msra.mxu0 0
  %184 = vmatprep.subr.bf16.mxu0 0
  %185 = vmatpush2.bf16.msra.mxu0 0
  %186 = vmatprep.subr.bf16.mxu0 0
  %187 = vmatpush2.bf16.msra.mxu0 0
  %188 = vmatprep.subr.bf16.mxu0 0
  %189 = vmatpush2.bf16.msra.mxu0 0
  %190 = vmatprep.subr.bf16.mxu0 0
  %191 = vmatpush2.bf16.msra.mxu0 0
  %192 = vmatprep.subr.bf16.mxu0 0
  %193 = vmatpush2.bf16.msra.mxu0 %v145
  %194 = vmatprep.mubr.bf16.mxu0 %v157
  %195 = vmatmul.mubr.bf16.gmra.mxu0 %v95
  %v196 = vpop.f32.mrf.mxu0
  %v197 = vadd.f32 %v81, %v196
  %v198 = vpop.f32.mrf.mxu0
  %v199 = vpop.f32.mrf.mxu0
  %v200 = vadd.f32 %v81, %v199
  %v201 = vpop.f32.mrf.mxu0
  %202 = vmatprep.mubr.bf16.mxu0 %v160
  %203 = vmatmul.mubr.bf16.gmra.mxu0 %v97
  %v204 = vpop.f32.mrf.mxu0
  %v205 = vadd.f32 %v81, %v204
  %v206 = vpop.f32.mrf.mxu0
  %v207 = vpop.f32.mrf.mxu0
  %v208 = vadd.f32 %v81, %v207
  %v209 = vpop.f32.mrf.mxu0
  %210 = vdwg.mxu0
  %v211 = vmul.f32 %v197, 0.2
  %v212 = vmul.f32 %v200, 0.2
  %v213 = vmul.f32 %v205, 0.2
  %v214 = vmul.f32 %v208, 0.2
  %v215 = vmax.f32 %v197, %v211
  %v216 = vmax.f32 %v200, %v212
  %v217 = vmax.f32 %v205, %v213
  %v218 = vmax.f32 %v208, %v214
  %v220 = vrot.slane %v215, 7
  %v222 = vrot.slane %v215, 6
  %vm224 = vcmask 1040384
  %v225 = vsel %vm224, %v215, %v220
  %vm226 = vcmask 1044480
  %v227 = vsel %vm226, %v225, %v222
  %v228 = vrot.slane %v215, 4
  %v230 = vrot.slane %v215, 3
  %v232 = vrot.slane %v215, 2
  %v234 = vsel %vm224, %v228, %v230
  %v235 = vsel %vm226, %v234, %v232
  %v237 = vrot.slane %v216, 7
  %v239 = vrot.slane %v216, 6
  %v241 = vsel %vm224, %v216, %v237
  %v242 = vsel %vm226, %v241, %v239
  %v243 = vrot.slane %v216, 4
  %v245 = vrot.slane %v216, 3
  %v247 = vrot.slane %v216, 2
  %v249 = vsel %vm224, %v243, %v245
  %v250 = vsel %vm226, %v249, %v247
  %v252 = vrot.slane %v217, 7
  %v254 = vrot.slane %v217, 6
  %v256 = vsel %vm224, %v217, %v252
  %v257 = vsel %vm226, %v256, %v254
  %v258 = vrot.slane %v217, 4
  %v260 = vrot.slane %v217, 3
  %v262 = vrot.slane %v217, 2
  %v264 = vsel %vm224, %v258, %v260
  %v265 = vsel %vm226, %v264, %v262
  %v267 = vrot.slane %v218, 7
  %v269 = vrot.slane %v218, 6
  %v271 = vsel %vm224, %v218, %v267
  %v272 = vsel %vm226, %v271, %v269
  %v273 = vrot.slane %v218, 4
  %v275 = vrot.slane %v218, 3
  %v277 = vrot.slane %v218, 2
  %v279 = vsel %vm224, %v273, %v275
  %v280 = vsel %vm226, %v279, %v277
  %v282 = vrot.slane %v227, 1
  %283 = vrot.lane.b32.xlu0 %v282, 32
  %v284 = vpop.permute.xlu0 %283
  %v286 = vrot.slane %v227, 2
  %287 = vrot.lane.b32.xlu0 %v286, 64
  %v288 = vpop.permute.xlu0 %287
  %290 = vrot.lane.b32.xlu0 %v227, 96
  %v291 = vpop.permute.xlu0 %290
  %294 = vrot.lane.b32.xlu0 %v286, 32
  %v295 = vpop.permute.xlu0 %294
  %298 = vrot.lane.b32.xlu0 %v235, 64
  %v299 = vpop.permute.xlu0 %298
  %v301 = vrot.slane %v235, 1
  %302 = vrot.lane.b32.xlu0 %v301, 96
  %v303 = vpop.permute.xlu0 %302
  %v305 = vrot.slane %v235, 2
  %vm307 = vcmask 261120
  %v308 = vsel %vm307, %v227, %v284
  %vm309 = vcmask 523264
  %v310 = vsel %vm309, %v308, %v288
  %vm311 = vcmask 785408
  %v312 = vsel %vm311, %v310, %v291
  %v313 = vsel %vm307, %v282, %v295
  %v314 = vsel %vm309, %v313, %v299
  %v315 = vsel %vm311, %v314, %v303
  %316 = vrot.lane.b32.xlu0 %v235, 96
  %v317 = vpop.permute.xlu0 %316
  %320 = vrot.lane.b32.xlu0 %v305, 32
  %v321 = vpop.permute.xlu0 %320
  %324 = vrot.lane.b32.xlu0 %v242, 64
  %v325 = vpop.permute.xlu0 %324
  %v327 = vrot.slane %v242, 1
  %328 = vrot.lane.b32.xlu0 %v327, 96
  %v329 = vpop.permute.xlu0 %328
  %v331 = vrot.slane %v242, 2
  %v332 = vsel %vm311, %v310, %v317
  %v333 = vsel %vm307, %v301, %v321
  %v334 = vsel %vm309, %v333, %v325
  %v335 = vsel %vm311, %v334, %v329
  %336 = vrot.lane.b32.xlu0 %v301, 32
  %v337 = vpop.permute.xlu0 %336
  %339 = vrot.lane.b32.xlu0 %v305, 64
  %v340 = vpop.permute.xlu0 %339
  %342 = vrot.lane.b32.xlu0 %v242, 96
  %v343 = vpop.permute.xlu0 %342
  %346 = vrot.lane.b32.xlu0 %v331, 32
  %v347 = vpop.permute.xlu0 %346
  %350 = vrot.lane.b32.xlu0 %v250, 64
  %v351 = vpop.permute.xlu0 %350
  %v353 = vrot.slane %v250, 1
  %354 = vrot.lane.b32.xlu0 %v353, 96
  %v355 = vpop.permute.xlu0 %354
  %v357 = vrot.slane %v250, 2
  %v359 = vsel %vm307, %v235, %v337
  %v360 = vsel %vm309, %v359, %v340
  %v361 = vsel %vm311, %v360, %v343
  %v362 = vsel %vm307, %v327, %v347
  %v363 = vsel %vm309, %v362, %v351
  %v364 = vsel %vm311, %v363, %v355
  %365 = vrot.lane.b32.xlu0 %v327, 32
  %v366 = vpop.permute.xlu0 %365
  %368 = vrot.lane.b32.xlu0 %v331, 64
  %v369 = vpop.permute.xlu0 %368
  %371 = vrot.lane.b32.xlu0 %v250, 96
  %v372 = vpop.permute.xlu0 %371
  %375 = vrot.lane.b32.xlu0 %v357, 32
  %v376 = vpop.permute.xlu0 %375
  %v378 = vsel %vm307, %v242, %v366
  %v379 = vsel %vm309, %v378, %v369
  %v380 = vsel %vm311, %v379, %v372
  %v381 = vsel %vm307, %v353, %v376
  %v382 = vsel %vm309, %v381, %v351
  %v383 = vsel %vm311, %v382, %v355
  %v385 = vrot.slane %v257, 1
  %386 = vrot.lane.b32.xlu0 %v385, 32
  %v387 = vpop.permute.xlu0 %386
  %v389 = vrot.slane %v257, 2
  %390 = vrot.lane.b32.xlu0 %v389, 64
  %v391 = vpop.permute.xlu0 %390
  %393 = vrot.lane.b32.xlu0 %v257, 96
  %v394 = vpop.permute.xlu0 %393
  %397 = vrot.lane.b32.xlu0 %v389, 32
  %v398 = vpop.permute.xlu0 %397
  %401 = vrot.lane.b32.xlu0 %v265, 64
  %v402 = vpop.permute.xlu0 %401
  %v404 = vrot.slane %v265, 1
  %405 = vrot.lane.b32.xlu0 %v404, 96
  %v406 = vpop.permute.xlu0 %405
  %v408 = vrot.slane %v265, 2
  %v410 = vsel %vm307, %v257, %v387
  %v411 = vsel %vm309, %v410, %v391
  %v412 = vsel %vm311, %v411, %v394
  %v413 = vsel %vm307, %v385, %v398
  %v414 = vsel %vm309, %v413, %v402
  %v415 = vsel %vm311, %v414, %v406
  %416 = vrot.lane.b32.xlu0 %v265, 96
  %v417 = vpop.permute.xlu0 %416
  %420 = vrot.lane.b32.xlu0 %v408, 32
  %v421 = vpop.permute.xlu0 %420
  %424 = vrot.lane.b32.xlu0 %v272, 64
  %v425 = vpop.permute.xlu0 %424
  %v427 = vrot.slane %v272, 1
  %428 = vrot.lane.b32.xlu0 %v427, 96
  %v429 = vpop.permute.xlu0 %428
  %v431 = vrot.slane %v272, 2
  %v432 = vsel %vm311, %v411, %v417
  %v433 = vsel %vm307, %v404, %v421
  %v434 = vsel %vm309, %v433, %v425
  %v435 = vsel %vm311, %v434, %v429
  %436 = vrot.lane.b32.xlu0 %v404, 32
  %v437 = vpop.permute.xlu0 %436
  %439 = vrot.lane.b32.xlu0 %v408, 64
  %v440 = vpop.permute.xlu0 %439
  %442 = vrot.lane.b32.xlu0 %v272, 96
  %v443 = vpop.permute.xlu0 %442
  %446 = vrot.lane.b32.xlu0 %v431, 32
  %v447 = vpop.permute.xlu0 %446
  %450 = vrot.lane.b32.xlu0 %v280, 64
  %v451 = vpop.permute.xlu0 %450
  %v453 = vrot.slane %v280, 1
  %454 = vrot.lane.b32.xlu0 %v453, 96
  %v455 = vpop.permute.xlu0 %454
  %v457 = vrot.slane %v280, 2
  %v459 = vsel %vm307, %v265, %v437
  %v460 = vsel %vm309, %v459, %v440
  %v461 = vsel %vm311, %v460, %v443
  %v462 = vsel %vm307, %v427, %v447
  %v463 = vsel %vm309, %v462, %v451
  %v464 = vsel %vm311, %v463, %v455
  %465 = vrot.lane.b32.xlu0 %v427, 32
  %v466 = vpop.permute.xlu0 %465
  %468 = vrot.lane.b32.xlu0 %v431, 64
  %v469 = vpop.permute.xlu0 %468
  %471 = vrot.lane.b32.xlu0 %v280, 96
  %v472 = vpop.permute.xlu0 %471
  %475 = vrot.lane.b32.xlu0 %v457, 32
  %v476 = vpop.permute.xlu0 %475
  %v478 = vsel %vm307, %v272, %v466
  %v479 = vsel %vm309, %v478, %v469
  %v480 = vsel %vm311, %v479, %v472
  %v481 = vsel %vm307, %v453, %v476
  %v482 = vsel %vm309, %v481, %v451
  %v483 = vsel %vm311, %v482, %v455
  %v486 = vrot.slane %v332, 4
  %v487 = vrot.slane %v335, 4
  %v488 = vrot.slane %v331, 4
  %v494 = vrot.slane %v380, 4
  %v495 = vrot.slane %v383, 4
  %v496 = vrot.slane %v357, 4
  %v502 = vrot.slane %v432, 4
  %v503 = vrot.slane %v435, 4
  %v504 = vrot.slane %v431, 4
  %v510 = vrot.slane %v480, 4
  %v511 = vrot.slane %v483, 4
  %v512 = vrot.slane %v457, 4
  %vm516 = vcmask 1043456
  %v517 = vsel %vm516, %v312, %v486
  %v518 = vsel %vm516, %v315, %v487
  %v519 = vsel %vm516, %v305, %v488
  %v520 = vsel %vm516, %v361, %v494
  %v521 = vsel %vm516, %v364, %v495
  %v522 = vsel %vm516, %v357, %v496
  %v523 = vsel %vm516, %v412, %v502
  %v524 = vsel %vm516, %v415, %v503
  %v525 = vsel %vm516, %v408, %v504
  %v526 = vsel %vm516, %v461, %v510
  %v527 = vsel %vm516, %v464, %v511
  %v528 = vsel %vm516, %v457, %v512
  %v529 = vpack.c.bf16 %v520, %v517
  %v530 = vpack.c.bf16 %v521, %v518
  %v531 = vpack.c.bf16 %v522, %v519
  %v532 = vpack.c.bf16 %v526, %v523
  %v533 = vpack.c.bf16 %v527, %v524
  %v534 = vpack.c.bf16 %v528, %v525
  %v535 = vld [vmem:[%s3] sm:$0xf]
  %v536 = vld [vmem:[%s3 + $0x4] sm:$0xf]
  %v537 = vld [vmem:[%s3 + $0x8] sm:$0xf]
  %v538 = vld [vmem:[%s3 + $0xc] sm:$0xf]
  %v539 = vld [vmem:[%s3 + $0x10] sm:$0xf]
  %v540 = vld [vmem:[%s3 + $0x14] sm:$0xf]
  %v541 = vld [vmem:[%s3 + $0x18] sm:$0xf]
  %v542 = vld [vmem:[%s3 + $0x1c] sm:$0xf]
  %v543 = vld [vmem:[%s3 + $0x20] sm:$0xf]
  %v544 = vld [vmem:[%s3 + $0x24] sm:$0xf]
  %v545 = vld [vmem:[%s3 + $0x28] sm:$0xf]
  %v546 = vld [vmem:[%s3 + $0x2c] sm:$0xf]
  %v547 = vld [vmem:[%s3 + $0x30] sm:$0xf]
  %v548 = vld [vmem:[%s3 + $0x34] sm:$0xf]
  %v549 = vld [vmem:[%s3 + $0x38] sm:$0xf]
  %v550 = vld [vmem:[%s3 + $0x3c] sm:$0xf]
  %v551 = vld [vmem:[%s3 + $0x40] sm:$0xf]
  %v552 = vld [vmem:[%s3 + $0x44] sm:$0xf]
  %v553 = vld [vmem:[%s3 + $0x48] sm:$0xf]
  %v554 = vld [vmem:[%s3 + $0x4c] sm:$0xf]
  %v555 = vld [vmem:[%s3 + $0x50] sm:$0xf]
  %v556 = vld [vmem:[%s3 + $0x54] sm:$0xf]
  %v557 = vld [vmem:[%s3 + $0x58] sm:$0xf]
  %v558 = vld [vmem:[%s3 + $0x5c] sm:$0xf]
  %v559 = vld [vmem:[%s3 + $0x60] sm:$0xf]
  %v560 = vld [vmem:[%s3 + $0x64] sm:$0xf]
  %v561 = vld [vmem:[%s3 + $0x68] sm:$0xf]
  %v562 = vld [vmem:[%s3 + $0x6c] sm:$0xf]
  %v563 = vld [vmem:[%s3 + $0x70] sm:$0xf]
  %v564 = vld [vmem:[%s3 + $0x74] sm:$0xf]
  %v565 = vld [vmem:[%s3 + $0x78] sm:$0xf]
  %v566 = vld [vmem:[%s3 + $0x7c] sm:$0xf]
  %v567 = vld [vmem:[%s3 + $0x80] sm:$0xf]
  %v568 = vld [vmem:[%s3 + $0x84] sm:$0xf]
  %v569 = vld [vmem:[%s3 + $0x88] sm:$0xf]
  %v570 = vld [vmem:[%s3 + $0x8c] sm:$0xf]
  %v571 = vld [vmem:[%s4] sm:$0x1]
  %v573 = vlaneseq
  %v574 = vshrl.u32 %v573, 7
  %v575 = vsub.s32 0, %v574
  %v576 = vrot.slane %v571, %v575
  %v614 = vunpack.c.l.b16 %v535
  %v615 = vunpack.c.l.b16 %v536
  %v616 = vunpack.c.l.b16 %v537
  %v617 = vunpack.c.l.b16 %v538
  %v618 = vunpack.c.l.b16 %v539
  %v619 = vunpack.c.l.b16 %v540
  %v620 = vunpack.c.l.b16 %v541
  %v621 = vunpack.c.l.b16 %v542
  %v622 = vunpack.c.l.b16 %v543
  %v623 = vunpack.c.l.b16 %v544
  %v624 = vunpack.c.l.b16 %v545
  %v625 = vunpack.c.l.b16 %v546
  %v626 = vunpack.c.l.b16 %v547
  %v627 = vunpack.c.l.b16 %v548
  %v628 = vunpack.c.l.b16 %v549
  %v629 = vunpack.c.l.b16 %v550
  %v630 = vunpack.c.l.b16 %v551
  %v631 = vunpack.c.l.b16 %v552
  %v632 = vunpack.c.l.b16 %v553
  %v633 = vunpack.c.l.b16 %v554
  %v634 = vunpack.c.l.b16 %v555
  %v635 = vunpack.c.l.b16 %v556
  %v636 = vunpack.c.l.b16 %v557
  %v637 = vunpack.c.l.b16 %v558
  %v638 = vunpack.c.l.b16 %v559
  %v639 = vunpack.c.l.b16 %v560
  %v640 = vunpack.c.l.b16 %v561
  %v641 = vunpack.c.l.b16 %v562
  %v642 = vunpack.c.l.b16 %v563
  %v643 = vunpack.c.l.b16 %v564
  %v644 = vunpack.c.l.b16 %v565
  %v645 = vunpack.c.l.b16 %v566
  %v646 = vunpack.c.l.b16 %v567
  %v647 = vunpack.c.l.b16 %v568
  %v648 = vunpack.c.l.b16 %v569
  %v649 = vunpack.c.l.b16 %v570
  %v650 = vpack.c.b16 %v615, %v614
  %v651 = vpack.c.b16 %v617, %v616
  %v652 = vpack.c.b16 %v619, %v618
  %v653 = vpack.c.b16 %v621, %v620
  %v654 = vpack.c.b16 %v623, %v622
  %v655 = vpack.c.b16 %v625, %v624
  %v656 = vpack.c.b16 %v627, %v626
  %v657 = vpack.c.b16 %v629, %v628
  %v658 = vpack.c.b16 %v631, %v630
  %v659 = vpack.c.b16 %v633, %v632
  %v660 = vpack.c.b16 %v635, %v634
  %v661 = vpack.c.b16 %v637, %v636
  %v662 = vpack.c.b16 %v639, %v638
  %v663 = vpack.c.b16 %v641, %v640
  %v664 = vpack.c.b16 %v643, %v642
  %v665 = vpack.c.b16 %v645, %v644
  %v666 = vpack.c.b16 %v647, %v646
  %v667 = vpack.c.b16 %v649, %v648
  %v687 = vsel %vm307, %v531, 0
  %v690 = vsel %vm307, %v534, 0
  %692 = vmatprep.subr.bf16.mxu0 0
  %693 = vmatpush1.bf16.msra.mxu0 %v657
  %694 = vmatprep.subr.bf16.mxu0 0
  %695 = vmatpush1.bf16.msra.mxu0 %v656
  %696 = vmatprep.subr.bf16.mxu0 0
  %697 = vmatpush1.bf16.msra.mxu0 %v655
  %698 = vmatprep.subr.bf16.mxu0 0
  %699 = vmatpush1.bf16.msra.mxu0 %v654
  %700 = vmatprep.subr.bf16.mxu0 0
  %701 = vmatpush1.bf16.msra.mxu0 %v653
  %702 = vmatprep.subr.bf16.mxu0 0
  %703 = vmatpush1.bf16.msra.mxu0 %v652
  %704 = vmatprep.subr.bf16.mxu0 0
  %705 = vmatpush1.bf16.msra.mxu0 %v651
  %706 = vmatprep.subr.bf16.mxu0 0
  %707 = vmatpush1.bf16.msra.mxu0 %v650
  %708 = vmatprep.subr.bf16.mxu0 0
  %709 = vmatpush2.bf16.msra.mxu0 %v665
  %710 = vmatprep.subr.bf16.mxu0 0
  %711 = vmatpush2.bf16.msra.mxu0 %v664
  %712 = vmatprep.subr.bf16.mxu0 0
  %713 = vmatpush2.bf16.msra.mxu0 %v663
  %714 = vmatprep.subr.bf16.mxu0 0
  %715 = vmatpush2.bf16.msra.mxu0 %v662
  %716 = vmatprep.subr.bf16.mxu0 0
  %717 = vmatpush2.bf16.msra.mxu0 %v661
  %718 = vmatprep.subr.bf16.mxu0 0
  %719 = vmatpush2.bf16.msra.mxu0 %v660
  %720 = vmatprep.subr.bf16.mxu0 0
  %721 = vmatpush2.bf16.msra.mxu0 %v659
  %722 = vmatprep.subr.bf16.mxu0 0
  %723 = vmatpush2.bf16.msra.mxu0 %v658
  %724 = vmatprep.mubr.bf16.mxu0 %v530
  %725 = vmatmul.mubr.bf16.gmra.mxu0 %v529
  %v726 = vpop.f32.mrf.mxu0
  %v727 = vadd.f32 %v576, %v726
  %v728 = vpop.f32.mrf.mxu0
  %v729 = vpop.f32.mrf.mxu0
  %v730 = vadd.f32 %v576, %v729
  %v731 = vpop.f32.mrf.mxu0
  %732 = vmatprep.mubr.bf16.mxu0 %v533
  %733 = vmatmul.mubr.bf16.gmra.mxu0 %v532
  %v734 = vpop.f32.mrf.mxu0
  %v735 = vadd.f32 %v576, %v734
  %v736 = vpop.f32.mrf.mxu0
  %v737 = vpop.f32.mrf.mxu0
  %v738 = vadd.f32 %v576, %v737
  %v739 = vpop.f32.mrf.mxu0
  %740 = vdwg.mxu0
  %741 = vmatprep.subr.bf16.mxu0 0
  %742 = vmatpush1.bf16.msra.mxu0 0
  %743 = vmatprep.subr.bf16.mxu0 0
  %744 = vmatpush1.bf16.msra.mxu0 0
  %745 = vmatprep.subr.bf16.mxu0 0
  %746 = vmatpush1.bf16.msra.mxu0 0
  %747 = vmatprep.subr.bf16.mxu0 0
  %748 = vmatpush1.bf16.msra.mxu0 0
  %749 = vmatprep.subr.bf16.mxu0 0
  %750 = vmatpush1.bf16.msra.mxu0 0
  %751 = vmatprep.subr.bf16.mxu0 0
  %752 = vmatpush1.bf16.msra.mxu0 0
  %753 = vmatprep.subr.bf16.mxu0 0
  %754 = vmatpush1.bf16.msra.mxu0 %v667
  %755 = vmatprep.subr.bf16.mxu0 0
  %756 = vmatpush1.bf16.msra.mxu0 %v666
  %757 = vmatprep.subr.bf16.mxu0 0
  %758 = vmatpush2.bf16.msra.mxu0 0
  %759 = vmatprep.subr.bf16.mxu0 0
  %760 = vmatpush2.bf16.msra.mxu0 0
  %761 = vmatprep.subr.bf16.mxu0 0
  %762 = vmatpush2.bf16.msra.mxu0 0
  %763 = vmatprep.subr.bf16.mxu0 0
  %764 = vmatpush2.bf16.msra.mxu0 0
  %765 = vmatprep.subr.bf16.mxu0 0
  %766 = vmatpush2.bf16.msra.mxu0 0
  %767 = vmatprep.subr.bf16.mxu0 0
  %768 = vmatpush2.bf16.msra.mxu0 0
  %769 = vmatprep.subr.bf16.mxu0 0
  %770 = vmatpush2.bf16.msra.mxu0 0
  %771 = vmatprep.subr.bf16.mxu0 0
  %772 = vmatpush2.bf16.msra.mxu0 0
  %773 = vmatprep.mubr.bf16.mxu0 0
  %774 = vmatmul.mubr.bf16.gmra.mxu0 %v687
  %v775 = vpop.f32.mrf.mxu0
  %v776 = vadd.f32 %v727, %v775
  %v777 = vpop.f32.mrf.mxu0
  %v778 = vpop.f32.mrf.mxu0
  %v779 = vadd.f32 %v730, %v778
  %v780 = vpop.f32.mrf.mxu0
  %781 = vmatprep.mubr.bf16.mxu0 0
  %782 = vmatmul.mubr.bf16.gmra.mxu0 %v690
  %v783 = vpop.f32.mrf.mxu0
  %v784 = vadd.f32 %v735, %v783
  %v785 = vpop.f32.mrf.mxu0
  %v786 = vpop.f32.mrf.mxu0
  %v787 = vadd.f32 %v738, %v786
  %v788 = vpop.f32.mrf.mxu0
  %789 = vdwg.mxu0
  %v790 = vmul.f32 %v776, 0.2
  %v791 = vmul.f32 %v779, 0.2
  %v792 = vmul.f32 %v784, 0.2
  %v793 = vmul.f32 %v787, 0.2
  %v794 = vmax.f32 %v776, %v790
  %v795 = vmax.f32 %v779, %v791
  %v796 = vmax.f32 %v784, %v792
  %v797 = vmax.f32 %v787, %v793
  %v798 = vld [vmem:[%s5] sm:$0x1]
  %v800 = vlaneseq
  %v801 = vshrl.u32 %v800, 7
  %v802 = vsub.s32 0, %v801
  %v803 = vrot.slane %v798, %v802
  %v805 = vmul.f32 %v794, %v803
  %v806 = vmul.f32 %v795, %v803
  %v807 = vmul.f32 %v796, %v803
  %v808 = vmul.f32 %v797, %v803
  %v809 = vsel %vm155, %v805, 0.0
  %810 = vadd.xlane.f32.xlu0 %v809
  %v811 = vpop.xlane.xlu0 %810
  %v812 = vsel %vm155, %v806, 0.0
  %813 = vadd.xlane.f32.xlu0 %v812
  %v814 = vpop.xlane.xlu0 %813
  %v815 = vsel %vm155, %v807, 0.0
  %816 = vadd.xlane.f32.xlu0 %v815
  %v817 = vpop.xlane.xlu0 %816
  %v818 = vsel %vm155, %v808, 0.0
  %819 = vadd.xlane.f32.xlu0 %v818
  %v820 = vpop.xlane.xlu0 %819
  %v821 = vld [vmem:[#allocation2] sm:$0x1]
  %v823 = vlaneseq
  %v824 = vshrl.u32 %v823, 7
  %v825 = vsub.s32 0, %v824
  %v826 = vrot.slane %v821, %v825
  %v828 = vadd.f32 %v811, %v826
  %v829 = vadd.f32 %v814, %v826
  %v830 = vadd.f32 %v817, %v826
  %v831 = vadd.f32 %v820, %v826
  %vm832 = vcmask 7168
  %833 = vst.msk [vmem:[%s14] sm:$0xff] %vm832, %v828
  %834 = vst.msk [vmem:[%s14 + $0x8] sm:$0xff] %vm832, %v829
  %835 = vst.msk [vmem:[%s14 + $0x10] sm:$0xff] %vm832, %v830
  %836 = vst.msk [vmem:[%s14 + $0x18] sm:$0xff] %vm832, %v831
  %v837 = vld [vmem:[%s7] sm:$0xff]
  %v838 = vld [vmem:[%s8] sm:$0xf]
  %v839 = vld [vmem:[%s8 + $0x4] sm:$0xf]
  %v840 = vld [vmem:[%s8 + $0x8] sm:$0xf]
  %v841 = vld [vmem:[%s8 + $0xc] sm:$0xf]
  %v842 = vld [vmem:[%s8 + $0x10] sm:$0xf]
  %v843 = vld [vmem:[%s8 + $0x14] sm:$0xf]
  %v844 = vld [vmem:[%s8 + $0x18] sm:$0xf]
  %v845 = vld [vmem:[%s8 + $0x1c] sm:$0xf]
  %v846 = vld [vmem:[%s8 + $0x20] sm:$0xf]
  %v847 = vld [vmem:[%s8 + $0x24] sm:$0xf]
  %v848 = vld [vmem:[%s8 + $0x28] sm:$0xf]
  %v849 = vld [vmem:[%s8 + $0x2c] sm:$0xf]
  %v850 = vld [vmem:[%s8 + $0x30] sm:$0xf]
  %v851 = vld [vmem:[%s8 + $0x34] sm:$0xf]
  %v852 = vld [vmem:[%s8 + $0x38] sm:$0xf]
  %v853 = vld [vmem:[%s8 + $0x3c] sm:$0xf]
  %v854 = vld [vmem:[%s8 + $0x40] sm:$0xf]
  %v855 = vld [vmem:[%s8 + $0x44] sm:$0xf]
  %v856 = vld [vmem:[%s9] sm:$0x1]
  %v858 = vlaneseq
  %v859 = vshrl.u32 %v858, 7
  %v860 = vsub.s32 0, %v859
  %v861 = vrot.slane %v856, %v860
  %v864 = vunpack.c.l.b16 %v837
  %v865 = vunpack.c.h.b16 %v837
  %v866 = vpack.c.b16 %v864, %v864
  %v867 = vpack.c.b16 %v865, %v865
  %v887 = vunpack.c.l.b16 %v838
  %v888 = vunpack.c.l.b16 %v839
  %v889 = vunpack.c.l.b16 %v840
  %v890 = vunpack.c.l.b16 %v841
  %v891 = vunpack.c.l.b16 %v842
  %v892 = vunpack.c.l.b16 %v843
  %v893 = vunpack.c.l.b16 %v844
  %v894 = vunpack.c.l.b16 %v845
  %v895 = vunpack.c.l.b16 %v846
  %v896 = vunpack.c.l.b16 %v847
  %v897 = vunpack.c.l.b16 %v848
  %v898 = vunpack.c.l.b16 %v849
  %v899 = vunpack.c.l.b16 %v850
  %v900 = vunpack.c.l.b16 %v851
  %v901 = vunpack.c.l.b16 %v852
  %v902 = vunpack.c.l.b16 %v853
  %v903 = vunpack.c.l.b16 %v854
  %v904 = vunpack.c.l.b16 %v855
  %v905 = vpack.c.b16 %v888, %v887
  %v906 = vpack.c.b16 %v890, %v889
  %v907 = vpack.c.b16 %v892, %v891
  %v908 = vpack.c.b16 %v894, %v893
  %v909 = vpack.c.b16 %v896, %v895
  %v910 = vpack.c.b16 %v898, %v897
  %v911 = vpack.c.b16 %v900, %v899
  %v912 = vpack.c.b16 %v902, %v901
  %v913 = vpack.c.b16 %v904, %v903
  %v924 = vsel %vm155, %v867, 0
  %926 = vmatprep.subr.bf16.mxu0 0
  %927 = vmatpush1.bf16.msra.mxu0 %v912
  %928 = vmatprep.subr.bf16.mxu0 0
  %929 = vmatpush1.bf16.msra.mxu0 %v911
  %930 = vmatprep.subr.bf16.mxu0 0
  %931 = vmatpush1.bf16.msra.mxu0 %v910
  %932 = vmatprep.subr.bf16.mxu0 0
  %933 = vmatpush1.bf16.msra.mxu0 %v909
  %934 = vmatprep.subr.bf16.mxu0 0
  %935 = vmatpush1.bf16.msra.mxu0 %v908
  %936 = vmatprep.subr.bf16.mxu0 0
  %937 = vmatpush1.bf16.msra.mxu0 %v907
  %938 = vmatprep.subr.bf16.mxu0 0
  %939 = vmatpush1.bf16.msra.mxu0 %v906
  %940 = vmatprep.subr.bf16.mxu0 0
  %941 = vmatpush1.bf16.msra.mxu0 %v905
  %942 = vmatprep.subr.bf16.mxu0 0
  %943 = vmatpush2.bf16.msra.mxu0 0
  %944 = vmatprep.subr.bf16.mxu0 0
  %945 = vmatpush2.bf16.msra.mxu0 0
  %946 = vmatprep.subr.bf16.mxu0 0
  %947 = vmatpush2.bf16.msra.mxu0 0
  %948 = vmatprep.subr.bf16.mxu0 0
  %949 = vmatpush2.bf16.msra.mxu0 0
  %950 = vmatprep.subr.bf16.mxu0 0
  %951 = vmatpush2.bf16.msra.mxu0 0
  %952 = vmatprep.subr.bf16.mxu0 0
  %953 = vmatpush2.bf16.msra.mxu0 0
  %954 = vmatprep.subr.bf16.mxu0 0
  %955 = vmatpush2.bf16.msra.mxu0 0
  %956 = vmatprep.subr.bf16.mxu0 0
  %957 = vmatpush2.bf16.msra.mxu0 %v913
  %958 = vmatprep.mubr.bf16.mxu0 %v924
  %959 = vmatmul.mubr.bf16.gmra.mxu0 %v866
  %v960 = vpop.f32.mrf.mxu0
  %v961 = vadd.f32 %v861, %v960
  %v962 = vpop.f32.mrf.mxu0
  %v963 = vpop.f32.mrf.mxu0
  %v964 = vpop.f32.mrf.mxu0
  %965 = vdwg.mxu0
  %v966 = vmul.f32 %v961, 0.2
  %v967 = vmax.f32 %v961, %v966
  %v969 = vrot.slane %v967, 7
  %v971 = vrot.slane %v967, 6
  %v973 = vsel %vm224, %v967, %v969
  %vm974 = vcmask 1042432
  %v975 = vsel %vm974, %v973, %v971
  %v976 = vrot.slane %v967, 2
  %v978 = vrot.slane %v967, 1
  %v980 = vsel %vm224, %v976, %v978
  %v981 = vsel %vm974, %v980, %v967
  %v982 = vrot.slane %v967, 4
  %v984 = vrot.slane %v967, 3
  %v986 = vsel %vm224, %v982, %v984
  %v987 = vsel %vm974, %v986, %v976
  %v988 = vrot.slane %v967, 5
  %v990 = vsel %vm224, %v971, %v988
  %v991 = vsel %vm974, %v990, %v982
  %v993 = vrot.slane %v975, 1
  %994 = vrot.lane.b32.xlu0 %v993, 32
  %v995 = vpop.permute.xlu0 %994
  %v997 = vrot.slane %v975, 2
  %998 = vrot.lane.b32.xlu0 %v997, 64
  %v999 = vpop.permute.xlu0 %998
  %1001 = vrot.lane.b32.xlu0 %v975, 96
  %v1002 = vpop.permute.xlu0 %1001
  %1005 = vrot.lane.b32.xlu0 %v997, 32
  %v1006 = vpop.permute.xlu0 %1005
  %1009 = vrot.lane.b32.xlu0 %v981, 64
  %v1010 = vpop.permute.xlu0 %1009
  %v1012 = vrot.slane %v981, 1
  %1013 = vrot.lane.b32.xlu0 %v1012, 96
  %v1014 = vpop.permute.xlu0 %1013
  %v1016 = vrot.slane %v981, 2
  %v1018 = vsel %vm307, %v975, %v995
  %v1019 = vsel %vm309, %v1018, %v999
  %v1020 = vsel %vm311, %v1019, %v1002
  %v1021 = vsel %vm307, %v993, %v1006
  %v1022 = vsel %vm309, %v1021, %v1010
  %v1023 = vsel %vm311, %v1022, %v1014
  %1024 = vrot.lane.b32.xlu0 %v981, 96
  %v1025 = vpop.permute.xlu0 %1024
  %1028 = vrot.lane.b32.xlu0 %v1016, 32
  %v1029 = vpop.permute.xlu0 %1028
  %v1031 = vsel %vm311, %v1019, %v1025
  %v1032 = vsel %vm307, %v1012, %v1029
  %v1033 = vsel %vm309, %v1032, %v1010
  %v1034 = vsel %vm311, %v1033, %v1014
  %v1036 = vrot.slane %v987, 1
  %1037 = vrot.lane.b32.xlu0 %v1036, 32
  %v1038 = vpop.permute.xlu0 %1037
  %v1040 = vrot.slane %v987, 2
  %1041 = vrot.lane.b32.xlu0 %v1040, 64
  %v1042 = vpop.permute.xlu0 %1041
  %1044 = vrot.lane.b32.xlu0 %v987, 96
  %v1045 = vpop.permute.xlu0 %1044
  %1048 = vrot.lane.b32.xlu0 %v1040, 32
  %v1049 = vpop.permute.xlu0 %1048
  %1052 = vrot.lane.b32.xlu0 %v991, 64
  %v1053 = vpop.permute.xlu0 %1052
  %v1055 = vrot.slane %v991, 1
  %1056 = vrot.lane.b32.xlu0 %v1055, 96
  %v1057 = vpop.permute.xlu0 %1056
  %v1059 = vrot.slane %v991, 2
  %v1060 = vsel %vm307, %v987, %v1038
  %v1061 = vsel %vm309, %v1060, %v1042
  %v1062 = vsel %vm311, %v1061, %v1045
  %v1063 = vsel %vm307, %v1036, %v1049
  %v1064 = vsel %vm309, %v1063, %v1053
  %v1065 = vsel %vm311, %v1064, %v1057
  %1066 = vrot.lane.b32.xlu0 %v991, 96
  %v1067 = vpop.permute.xlu0 %1066
  %1070 = vrot.lane.b32.xlu0 %v1059, 32
  %v1071 = vpop.permute.xlu0 %1070
  %v1073 = vsel %vm311, %v1061, %v1067
  %v1074 = vsel %vm307, %v1055, %v1071
  %v1075 = vsel %vm309, %v1074, %v1053
  %v1076 = vsel %vm311, %v1075, %v1057
  %v1079 = vrot.slane %v1031, 6
  %v1080 = vrot.slane %v1034, 6
  %v1081 = vrot.slane %v1016, 6
  %v1087 = vrot.slane %v1062, 4
  %v1088 = vrot.slane %v1065, 4
  %v1089 = vrot.slane %v1059, 4
  %v1095 = vrot.slane %v1073, 2
  %v1096 = vrot.slane %v1076, 2
  %v1097 = vrot.slane %v1059, 2
  %vm1101 = vcmask 1041408
  %v1102 = vsel %vm1101, %v1020, %v1079
  %v1103 = vsel %vm1101, %v1023, %v1080
  %v1104 = vsel %vm1101, %v1016, %v1081
  %v1105 = vsel %vm516, %v1102, %v1087
  %v1106 = vsel %vm516, %v1103, %v1088
  %v1107 = vsel %vm516, %v1104, %v1089
  %vm1108 = vcmask 1045504
  %v1109 = vsel %vm1108, %v1105, %v1095
  %v1110 = vsel %vm1108, %v1106, %v1096
  %v1111 = vsel %vm1108, %v1107, %v1097
  %v1112 = vpack.c.bf16 %v1109, %v1109
  %v1113 = vpack.c.bf16 %v1110, %v1110
  %v1114 = vpack.c.bf16 %v1111, %v1111
  %v1115 = vld [vmem:[%s10] sm:$0xf]
  %v1116 = vld [vmem:[%s10 + $0x4] sm:$0xf]
  %v1117 = vld [vmem:[%s10 + $0x8] sm:$0xf]
  %v1118 = vld [vmem:[%s10 + $0xc] sm:$0xf]
  %v1119 = vld [vmem:[%s10 + $0x10] sm:$0xf]
  %v1120 = vld [vmem:[%s10 + $0x14] sm:$0xf]
  %v1121 = vld [vmem:[%s10 + $0x18] sm:$0xf]
  %v1122 = vld [vmem:[%s10 + $0x1c] sm:$0xf]
  %v1123 = vld [vmem:[%s10 + $0x20] sm:$0xf]
  %v1124 = vld [vmem:[%s10 + $0x24] sm:$0xf]
  %v1125 = vld [vmem:[%s10 + $0x28] sm:$0xf]
  %v1126 = vld [vmem:[%s10 + $0x2c] sm:$0xf]
  %v1127 = vld [vmem:[%s10 + $0x30] sm:$0xf]
  %v1128 = vld [vmem:[%s10 + $0x34] sm:$0xf]
  %v1129 = vld [vmem:[%s10 + $0x38] sm:$0xf]
  %v1130 = vld [vmem:[%s10 + $0x3c] sm:$0xf]
  %v1131 = vld [vmem:[%s10 + $0x40] sm:$0xf]
  %v1132 = vld [vmem:[%s10 + $0x44] sm:$0xf]
  %v1133 = vld [vmem:[%s10 + $0x48] sm:$0xf]
  %v1134 = vld [vmem:[%s10 + $0x4c] sm:$0xf]
  %v1135 = vld [vmem:[%s10 + $0x50] sm:$0xf]
  %v1136 = vld [vmem:[%s10 + $0x54] sm:$0xf]
  %v1137 = vld [vmem:[%s10 + $0x58] sm:$0xf]
  %v1138 = vld [vmem:[%s10 + $0x5c] sm:$0xf]
  %v1139 = vld [vmem:[%s10 + $0x60] sm:$0xf]
  %v1140 = vld [vmem:[%s10 + $0x64] sm:$0xf]
  %v1141 = vld [vmem:[%s10 + $0x68] sm:$0xf]
  %v1142 = vld [vmem:[%s10 + $0x6c] sm:$0xf]
  %v1143 = vld [vmem:[%s10 + $0x70] sm:$0xf]
  %v1144 = vld [vmem:[%s10 + $0x74] sm:$0xf]
  %v1145 = vld [vmem:[%s10 + $0x78] sm:$0xf]
  %v1146 = vld [vmem:[%s10 + $0x7c] sm:$0xf]
  %v1147 = vld [vmem:[%s10 + $0x80] sm:$0xf]
  %v1148 = vld [vmem:[%s10 + $0x84] sm:$0xf]
  %v1149 = vld [vmem:[%s10 + $0x88] sm:$0xf]
  %v1150 = vld [vmem:[%s10 + $0x8c] sm:$0xf]
  %v1151 = vld [vmem:[%s11] sm:$0x1]
  %v1153 = vlaneseq
  %v1154 = vshrl.u32 %v1153, 7
  %v1155 = vsub.s32 0, %v1154
  %v1156 = vrot.slane %v1151, %v1155
  %v1194 = vunpack.c.l.b16 %v1115
  %v1195 = vunpack.c.l.b16 %v1116
  %v1196 = vunpack.c.l.b16 %v1117
  %v1197 = vunpack.c.l.b16 %v1118
  %v1198 = vunpack.c.l.b16 %v1119
  %v1199 = vunpack.c.l.b16 %v1120
  %v1200 = vunpack.c.l.b16 %v1121
  %v1201 = vunpack.c.l.b16 %v1122
  %v1202 = vunpack.c.l.b16 %v1123
  %v1203 = vunpack.c.l.b16 %v1124
  %v1204 = vunpack.c.l.b16 %v1125
  %v1205 = vunpack.c.l.b16 %v1126
  %v1206 = vunpack.c.l.b16 %v1127
  %v1207 = vunpack.c.l.b16 %v1128
  %v1208 = vunpack.c.l.b16 %v1129
  %v1209 = vunpack.c.l.b16 %v1130
  %v1210 = vunpack.c.l.b16 %v1131
  %v1211 = vunpack.c.l.b16 %v1132
  %v1212 = vunpack.c.l.b16 %v1133
  %v1213 = vunpack.c.l.b16 %v1134
  %v1214 = vunpack.c.l.b16 %v1135
  %v1215 = vunpack.c.l.b16 %v1136
  %v1216 = vunpack.c.l.b16 %v1137
  %v1217 = vunpack.c.l.b16 %v1138
  %v1218 = vunpack.c.l.b16 %v1139
  %v1219 = vunpack.c.l.b16 %v1140
  %v1220 = vunpack.c.l.b16 %v1141
  %v1221 = vunpack.c.l.b16 %v1142
  %v1222 = vunpack.c.l.b16 %v1143
  %v1223 = vunpack.c.l.b16 %v1144
  %v1224 = vunpack.c.l.b16 %v1145
  %v1225 = vunpack.c.l.b16 %v1146
  %v1226 = vunpack.c.l.b16 %v1147
  %v1227 = vunpack.c.l.b16 %v1148
  %v1228 = vunpack.c.l.b16 %v1149
  %v1229 = vunpack.c.l.b16 %v1150
  %v1230 = vpack.c.b16 %v1195, %v1194
  %v1231 = vpack.c.b16 %v1197, %v1196
  %v1232 = vpack.c.b16 %v1199, %v1198
  %v1233 = vpack.c.b16 %v1201, %v1200
  %v1234 = vpack.c.b16 %v1203, %v1202
  %v1235 = vpack.c.b16 %v1205, %v1204
  %v1236 = vpack.c.b16 %v1207, %v1206
  %v1237 = vpack.c.b16 %v1209, %v1208
  %v1238 = vpack.c.b16 %v1211, %v1210
  %v1239 = vpack.c.b16 %v1213, %v1212
  %v1240 = vpack.c.b16 %v1215, %v1214
  %v1241 = vpack.c.b16 %v1217, %v1216
  %v1242 = vpack.c.b16 %v1219, %v1218
  %v1243 = vpack.c.b16 %v1221, %v1220
  %v1244 = vpack.c.b16 %v1223, %v1222
  %v1245 = vpack.c.b16 %v1225, %v1224
  %v1246 = vpack.c.b16 %v1227, %v1226
  %v1247 = vpack.c.b16 %v1229, %v1228
  %v1267 = vsel %vm307, %v1114, 0
  %1269 = vmatprep.subr.bf16.mxu0 0
  %1270 = vmatpush1.bf16.msra.mxu0 %v1237
  %1271 = vmatprep.subr.bf16.mxu0 0
  %1272 = vmatpush1.bf16.msra.mxu0 %v1236
  %1273 = vmatprep.subr.bf16.mxu0 0
  %1274 = vmatpush1.bf16.msra.mxu0 %v1235
  %1275 = vmatprep.subr.bf16.mxu0 0
  %1276 = vmatpush1.bf16.msra.mxu0 %v1234
  %1277 = vmatprep.subr.bf16.mxu0 0
  %1278 = vmatpush1.bf16.msra.mxu0 %v1233
  %1279 = vmatprep.subr.bf16.mxu0 0
  %1280 = vmatpush1.bf16.msra.mxu0 %v1232
  %1281 = vmatprep.subr.bf16.mxu0 0
  %1282 = vmatpush1.bf16.msra.mxu0 %v1231
  %1283 = vmatprep.subr.bf16.mxu0 0
  %1284 = vmatpush1.bf16.msra.mxu0 %v1230
  %1285 = vmatprep.subr.bf16.mxu0 0
  %1286 = vmatpush2.bf16.msra.mxu0 %v1245
  %1287 = vmatprep.subr.bf16.mxu0 0
  %1288 = vmatpush2.bf16.msra.mxu0 %v1244
  %1289 = vmatprep.subr.bf16.mxu0 0
  %1290 = vmatpush2.bf16.msra.mxu0 %v1243
  %1291 = vmatprep.subr.bf16.mxu0 0
  %1292 = vmatpush2.bf16.msra.mxu0 %v1242
  %1293 = vmatprep.subr.bf16.mxu0 0
  %1294 = vmatpush2.bf16.msra.mxu0 %v1241
  %1295 = vmatprep.subr.bf16.mxu0 0
  %1296 = vmatpush2.bf16.msra.mxu0 %v1240
  %1297 = vmatprep.subr.bf16.mxu0 0
  %1298 = vmatpush2.bf16.msra.mxu0 %v1239
  %1299 = vmatprep.subr.bf16.mxu0 0
  %1300 = vmatpush2.bf16.msra.mxu0 %v1238
  %1301 = vmatprep.mubr.bf16.mxu0 %v1113
  %1302 = vmatmul.mubr.bf16.gmra.mxu0 %v1112
  %v1303 = vpop.f32.mrf.mxu0
  %v1304 = vadd.f32 %v1156, %v1303
  %v1305 = vpop.f32.mrf.mxu0
  %v1306 = vpop.f32.mrf.mxu0
  %v1307 = vpop.f32.mrf.mxu0
  %1308 = vdwg.mxu0
  %1309 = vmatprep.subr.bf16.mxu0 0
  %1310 = vmatpush1.bf16.msra.mxu0 0
  %1311 = vmatprep.subr.bf16.mxu0 0
  %1312 = vmatpush1.bf16.msra.mxu0 0
  %1313 = vmatprep.subr.bf16.mxu0 0
  %1314 = vmatpush1.bf16.msra.mxu0 0
  %1315 = vmatprep.subr.bf16.mxu0 0
  %1316 = vmatpush1.bf16.msra.mxu0 0
  %1317 = vmatprep.subr.bf16.mxu0 0
  %1318 = vmatpush1.bf16.msra.mxu0 0
  %1319 = vmatprep.subr.bf16.mxu0 0
  %1320 = vmatpush1.bf16.msra.mxu0 0
  %1321 = vmatprep.subr.bf16.mxu0 0
  %1322 = vmatpush1.bf16.msra.mxu0 %v1247
  %1323 = vmatprep.subr.bf16.mxu0 0
  %1324 = vmatpush1.bf16.msra.mxu0 %v1246
  %1325 = vmatprep.subr.bf16.mxu0 0
  %1326 = vmatpush2.bf16.msra.mxu0 0
  %1327 = vmatprep.subr.bf16.mxu0 0
  %1328 = vmatpush2.bf16.msra.mxu0 0
  %1329 = vmatprep.subr.bf16.mxu0 0
  %1330 = vmatpush2.bf16.msra.mxu0 0
  %1331 = vmatprep.subr.bf16.mxu0 0
  %1332 = vmatpush2.bf16.msra.mxu0 0
  %1333 = vmatprep.subr.bf16.mxu0 0
  %1334 = vmatpush2.bf16.msra.mxu0 0
  %1335 = vmatprep.subr.bf16.mxu0 0
  %1336 = vmatpush2.bf16.msra.mxu0 0
  %1337 = vmatprep.subr.bf16.mxu0 0
  %1338 = vmatpush2.bf16.msra.mxu0 0
  %1339 = vmatprep.subr.bf16.mxu0 0
  %1340 = vmatpush2.bf16.msra.mxu0 0
  %1341 = vmatprep.mubr.bf16.mxu0 0
  %1342 = vmatmul.mubr.bf16.gmra.mxu0 %v1267
  %v1343 = vpop.f32.mrf.mxu0
  %v1344 = vadd.f32 %v1304, %v1343
  %v1345 = vpop.f32.mrf.mxu0
  %v1346 = vpop.f32.mrf.mxu0
  %v1347 = vpop.f32.mrf.mxu0
  %1348 = vdwg.mxu0
  %v1349 = vmul.f32 %v1344, 0.2
  %v1350 = vmax.f32 %v1344, %v1349
  %v1351 = vld [vmem:[%s12] sm:$0x1]
  %v1353 = vlaneseq
  %v1354 = vshrl.u32 %v1353, 7
  %v1355 = vsub.s32 0, %v1354
  %v1356 = vrot.slane %v1351, %v1355
  %v1358 = vmul.f32 %v1350, %v1356
  %v1359 = vsel %vm155, %v1358, 0.0
  %1360 = vadd.xlane.f32.xlu0 %v1359
  %v1361 = vpop.xlane.xlu0 %1360
  %v1362 = vld [vmem:[#allocation3] sm:$0x1]
  %v1364 = vlaneseq
  %v1365 = vshrl.u32 %v1364, 7
  %v1366 = vsub.s32 0, %v1365
  %v1367 = vrot.slane %v1362, %v1366
  %v1369 = vadd.f32 %v1361, %v1367
  %1370 = vst.msk [vmem:[%s15] sm:$0xff] %vm832, %v1369
  // Predicated region
  $region58: #{_lambda_.1} parent=0 // pred_check
    _
  $region59: #{_lambda_.1} parent=0 // pred_check_branch
    %1372 = sbr.rel (0) target = $region61
  $region60: #{_lambda_.1} parent=0 // pred_region
    _
  $region61: #{_lambda_.1} parent=0 // pred_fallthru
    _
  // Predicated region
  $region62: #{_lambda_.1} parent=0 // pred_check
    _
  $region63: #{_lambda_.1} parent=0 // pred_check_branch
    %1374 = sbr.rel (0) target = $region65
  $region64: #{_lambda_.1} parent=0 // pred_region
    _
  $region65: #{_lambda_.1} parent=0 // pred_fallthru
    _
  // Predicated region
  $region66: #{_lambda_.1} parent=0 // pred_check
    _
  $region67: #{_lambda_.1} parent=0 // pred_check_branch
    %1376 = sbr.rel (0) target = $region69
  $region68: #{_lambda_.1} parent=0 // pred_region
    _
  $region69: #{_lambda_.1} parent=0 // pred_fallthru
    _
  // Predicated region
  $region70: #{_lambda_.1} parent=0 // pred_check
    _
  $region71: #{_lambda_.1} parent=0 // pred_check_branch
    %1378 = sbr.rel (0) target = $region73
  $region72: #{_lambda_.1} parent=0 // pred_region
    _
  $region73: #{_lambda_.1} parent=0 // pred_fallthru
    _

</llo_original>
